<compile_context>
chip_gen: v7x
topology: tpu7x:2x2x1
jax: 0.10.0
libtpu: 0.0.40
codegen_flags: <defaults>
</compile_context>

<pallas_src>
import jax
import jax.numpy as jnp
from jax.experimental import pallas as pl
from jax.experimental.pallas import tpu as pltpu


def _round_up(x, m):
    return ((x + m - 1) // m) * m


def _pick_tile(m, target):
    """Lane tile: multiple of 128, <= target, preferring >= 2 tiles when m > 128."""
    if m <= 128:
        return 128
    half = _round_up((m + 1) // 2, 128)
    return min(target, half, _round_up(m, 128))


# ----------------------------- Pallas kernels ------------------------------

def _conv_pool_kernel(w_ref, pt_ref, b_ref, o_ref):
    # Grid = (oc_tile, m_tile, pool_tap).  For each pool tap t we compute the
    # conv (on the pooled output grid, shifted by that tap), add bias, ReLU,
    # and max-accumulate into the resident output block.
    t = pl.program_id(2)
    y = jnp.dot(w_ref[...], pt_ref[0], preferred_element_type=jnp.float32)
    y = jnp.maximum(y + b_ref[...], 0.0)

    @pl.when(t == 0)
    def _():
        o_ref[...] = y

    @pl.when(t != 0)
    def _():
        o_ref[...] = jnp.maximum(o_ref[...], y)


def _fc_fused_kernel(x_ref, w1_ref, b1_ref, w2_ref, b2_ref, w3_ref, b3_ref, o_ref):
    h = jnp.dot(x_ref[...], w1_ref[...], preferred_element_type=jnp.float32) + b1_ref[...]
    h = jnp.maximum(h, 0.0)
    h = jnp.dot(h, w2_ref[...], preferred_element_type=jnp.float32) + b2_ref[...]
    h = jnp.maximum(h, 0.0)
    y = jnp.dot(h, w3_ref[...], preferred_element_type=jnp.float32) + b3_ref[...]
    o_ref[...] = y.astype(o_ref.dtype)


# ------------------------------ layer wrappers ------------------------------

def conv_relu_pool_cf(x_cf, wmat, bias_col, kh, kw, *, tm_target=1024):
    """VALID stride-1 conv + bias + ReLU + 2x2/2 max-pool, fused in one kernel.

    x_cf: (C, N, H, W) channels-first-as-rows; wmat: (OCp, Kp) with columns
    ordered (c, kh, kw) and zero-padded to Kp; bias_col: (OCp, 1).
    Returns the POOLED activation (OCp, N, Ho, Wo).
    """
    C, N, H, W = x_cf.shape
    OCp, Kp = wmat.shape
    OH, OW = H - kh + 1, W - kw + 1
    Ho, Wo = OH // 2, OW // 2
    K = C * kh * kw
    M = N * Ho * Wo                      # pooled-output columns (4x fewer than conv)

    # Transposed im2col for each of the 4 pool taps:
    #   pt[t, (c,i,j), (n,ph,pw)] = x[c, n, 2*ph + di + i, 2*pw + dj + j]
    pts = []
    for di in (0, 1):
        for dj in (0, 1):
            slabs = [x_cf[:, :, di + i: di + i + 2 * Ho: 2,
                             dj + j: dj + j + 2 * Wo: 2]
                     for i in range(kh) for j in range(kw)]
            pts.append(jnp.stack(slabs, axis=1).reshape(K, M))
    pt4 = jnp.stack(pts, axis=0)                          # (4, K, M)

    TM = _pick_tile(M, tm_target)
    Mp = _round_up(M, TM)
    pt4 = jnp.pad(pt4, ((0, 0), (0, Kp - K), (0, Mp - M)))

    TOC = 8
    grid = (OCp // TOC, Mp // TM, 4)

    y = pl.pallas_call(
        _conv_pool_kernel,
        out_shape=jax.ShapeDtypeStruct((OCp, Mp), jnp.float32),
        grid=grid,
        in_specs=[
            pl.BlockSpec((TOC, Kp), lambda o, m, t: (o, 0)),     # weights resident
            pl.BlockSpec((1, Kp, TM), lambda o, m, t: (t, 0, m)),  # stream tap/M tiles
            pl.BlockSpec((TOC, 1), lambda o, m, t: (o, 0)),      # bias resident
        ],
        out_specs=pl.BlockSpec((TOC, TM), lambda o, m, t: (o, m)),  # resident over taps
        compiler_params=pltpu.CompilerParams(
            dimension_semantics=("parallel", "parallel", "arbitrary"),
            vmem_limit_bytes=32 * 1024 * 1024),
        cost_estimate=pl.CostEstimate(
            flops=2 * OCp * Kp * Mp * 4,
            transcendentals=0,
            bytes_accessed=4 * (OCp * Kp + 4 * Kp * Mp + OCp * Mp)),
    )(wmat, pt4, bias_col)
    return y[:, :M].reshape(OCp, N, Ho, Wo)


def fc_fused(x, w1T, b1, w2T, b2, w3T, b3, *, tb_target=256):
    """relu(x@w1T+b1) -> relu(.@w2T+b2) -> .@w3T+b3 in ONE Pallas call.

    All weight lane widths are pre-padded to 128 in prepare_params."""
    B, K = x.shape
    N1, N2, N3 = w1T.shape[1], w2T.shape[1], w3T.shape[1]
    TB = min(_round_up(B, 8), tb_target)
    Bp = _round_up(B, TB)
    xp = jnp.pad(x, ((0, Bp - B), (0, 0))) if Bp != B else x
    res = lambda i: (0, 0)   # weights/biases resident across batch tiles
    y = pl.pallas_call(
        _fc_fused_kernel,
        out_shape=jax.ShapeDtypeStruct((Bp, N3), jnp.float32),
        grid=(Bp // TB,),
        in_specs=[
            pl.BlockSpec((TB, K), lambda i: (i, 0)),
            pl.BlockSpec((K, N1), res), pl.BlockSpec((1, N1), res),
            pl.BlockSpec((N1, N2), res), pl.BlockSpec((1, N2), res),
            pl.BlockSpec((N2, N3), res), pl.BlockSpec((1, N3), res),
        ],
        out_specs=pl.BlockSpec((TB, N3), lambda i: (i, 0)),
        compiler_params=pltpu.CompilerParams(
            dimension_semantics=("parallel",)),
        cost_estimate=pl.CostEstimate(
            flops=2 * Bp * (K * N1 + N1 * N2 + N2 * N3),
            transcendentals=0,
            bytes_accessed=4 * (Bp * K + K * N1 + N1 * N2 + N2 * N3 + Bp * N3)),
    )(xp, w1T, b1, w2T, b2, w3T, b3)
    return y[:B]


# ------------------------------- parameters ---------------------------------

def init_params(key):
    ks = jax.random.split(key, 10)
    s = 0.05
    return {
        "conv1_w": s * jax.random.normal(ks[0], (6, 3, 5, 5), jnp.float32),
        "conv1_b": s * jax.random.normal(ks[1], (6,), jnp.float32),
        "conv2_w": s * jax.random.normal(ks[2], (16, 6, 5, 5), jnp.float32),
        "conv2_b": s * jax.random.normal(ks[3], (16,), jnp.float32),
        "fc1_w": s * jax.random.normal(ks[4], (120, 16 * 5 * 5), jnp.float32),
        "fc1_b": s * jax.random.normal(ks[5], (120,), jnp.float32),
        "fc2_w": s * jax.random.normal(ks[6], (84, 120), jnp.float32),
        "fc2_b": s * jax.random.normal(ks[7], (84,), jnp.float32),
        "fc3_w": s * jax.random.normal(ks[8], (10, 84), jnp.float32),
        "fc3_b": s * jax.random.normal(ks[9], (10,), jnp.float32),
    }


def prepare_params(raw):
    """One-time conversion into kernel-ready, padded layouts:
      * conv weights -> (OC_pad, K_pad) matrices, biases -> (OC_pad, 1) columns
        (conv1 OC 6->8; conv2 input channels 6->8; K padded to mult. of 128),
      * FC weights pre-transposed to (K, N) with lane widths padded to 128."""
    def conv_mat(w, oc_pad, ic_pad):
        oc, ic, kh, kw = w.shape
        w = jnp.pad(w, ((0, oc_pad - oc), (0, ic_pad - ic), (0, 0), (0, 0)))
        k = ic_pad * kh * kw
        kp = _round_up(k, 128)
        return jnp.pad(w.reshape(oc_pad, k), ((0, 0), (0, kp - k)))

    def col(b, n_pad):
        return jnp.pad(b, (0, n_pad - b.shape[0])).reshape(-1, 1)

    def row(b, n_pad):
        return jnp.pad(b, (0, n_pad - b.shape[0])).reshape(1, -1)

    def fcT(w, n_pad, k_pad=None):
        wt = w.T
        k, n = wt.shape
        k_pad = k if k_pad is None else k_pad
        return jnp.pad(wt, ((0, k_pad - k), (0, n_pad - n)))

    return {
        "conv1_wmat": conv_mat(raw["conv1_w"], 8, 3),      # (8, 128)
        "conv1_b": col(raw["conv1_b"], 8),                 # (8, 1)
        "conv2_wmat": conv_mat(raw["conv2_w"], 16, 8),     # (16, 256)
        "conv2_b": col(raw["conv2_b"], 16),                # (16, 1)
        "fc1_wT": fcT(raw["fc1_w"], 128),                  # (400, 128)
        "fc1_b": row(raw["fc1_b"], 128),
        "fc2_wT": fcT(raw["fc2_w"], 128, 128),             # (128, 128)
        "fc2_b": row(raw["fc2_b"], 128),
        "fc3_wT": fcT(raw["fc3_w"], 128, 128),             # (128, 128)
        "fc3_b": row(raw["fc3_b"], 128),
    }


# -------------------------------- forward -----------------------------------

def net_forward(params, x):
    # x: (N, 3, 32, 32) NCHW float32
    x = jnp.transpose(x, (1, 0, 2, 3))                                        # (3, N, 32, 32)
    x = conv_relu_pool_cf(x, params["conv1_wmat"], params["conv1_b"], 5, 5)   # (8, N, 14, 14)
    x = conv_relu_pool_cf(x, params["conv2_wmat"], params["conv2_b"], 5, 5)   # (16, N, 5, 5)
    n = x.shape[1]
    x = jnp.transpose(x, (1, 0, 2, 3)).reshape(n, 16 * 5 * 5)                 # == torch .view
    y = fc_fused(x, params["fc1_wT"], params["fc1_b"],
                 params["fc2_wT"], params["fc2_b"],
                 params["fc3_wT"], params["fc3_b"])                           # (N, 128)
    return y[:, :10]


# -------------------------- pure-JAX reference ------------------------------

def reference_forward(raw, x):
    hp = jax.lax.Precision.HIGHEST

    def conv(h, w, b):
        y = jax.lax.conv_general_dilated(
            h, w, (1, 1), "VALID",
            dimension_numbers=("NCHW", "OIHW", "NCHW"), precision=hp)
        return jax.nn.relu(y + b[None, :, None, None])

    def pool(h):
        return jax.lax.reduce_window(h, -jnp.inf, jax.lax.max,
                                     (1, 1, 2, 2), (1, 1, 2, 2), "VALID")

    y = pool(conv(x, raw["conv1_w"], raw["conv1_b"]))
    y = pool(conv(y, raw["conv2_w"], raw["conv2_b"]))
    y = y.reshape(y.shape[0], -1)
    y = jax.nn.relu(jnp.dot(y, raw["fc1_w"].T, precision=hp) + raw["fc1_b"])
    y = jax.nn.relu(jnp.dot(y, raw["fc2_w"].T, precision=hp) + raw["fc2_b"])
    return jnp.dot(y, raw["fc3_w"].T, precision=hp) + raw["fc3_b"]


if __name__ == "__main__":
    x = jax.random.normal(jax.random.PRNGKey(0), (2, 3, 32, 32), dtype=jnp.float32)
    raw = init_params(jax.random.PRNGKey(1))
    params = prepare_params(raw)

    out = jax.block_until_ready(jax.jit(net_forward)(params, x))
    assert out.shape == (2, 10) and out.dtype == jnp.float32

    ref = jax.block_until_ready(reference_forward(raw, x))
    assert jnp.allclose(out, ref, atol=2e-3, rtol=2e-3), \
        float(jnp.max(jnp.abs(out - ref)))
    print("KERNEL_OK")
</pallas_src>

<mosaic_0001>
module attributes {stable_mosaic.version = 11 : i64} {
  func.func @_conv_pool_kernel(%arg0: i32, %arg1: i32, %arg2: i32, %arg3: memref<8x128xf32, #tpu.memory_space<vmem>>, %arg4: memref<1x128x256xf32, #tpu.memory_space<vmem>>, %arg5: memref<8x1xf32, #tpu.memory_space<vmem>>, %arg6: memref<8x256xf32, #tpu.memory_space<vmem>>) attributes {dimension_semantics = [#tpu.dimension_semantics<parallel>, #tpu.dimension_semantics<parallel>, #tpu.dimension_semantics<arbitrary>], iteration_bounds = array<i64: 1, 2, 4>, scalar_prefetch = 0 : i64, scratch_operands = 0 : i64, tpu.core_type = #tpu.core_type<tc>, window_params = [{transform_indices = @transform_0, window_bounds = array<i64: 8, 128>}, {transform_indices = @transform_1, window_bounds = array<i64: 1, 128, 256>}, {transform_indices = @transform_2, window_bounds = array<i64: 8, 1>}, {transform_indices = @transform_3, window_bounds = array<i64: 8, 256>}]} {
    %c0 = arith.constant 0 : index
    %c0_0 = arith.constant 0 : index
    %0 = vector.load %arg3[%c0, %c0_0] : memref<8x128xf32, #tpu.memory_space<vmem>>, vector<8x128xf32>
    %c0_1 = arith.constant 0 : index
    %c0_2 = arith.constant 0 : index
    %c0_3 = arith.constant 0 : index
    %1 = vector.load %arg4[%c0_1, %c0_2, %c0_3] : memref<1x128x256xf32, #tpu.memory_space<vmem>>, vector<1x128x256xf32>
    %2 = vector.shape_cast %1 : vector<1x128x256xf32> to vector<128x256xf32>
    %cst = arith.constant dense<0.000000e+00> : vector<8x256xf32>
    %3 = tpu.matmul %0, %2, %cst {dimension_numbers = #tpu.dot_dimension_numbers<[1], [0], [0], [1], [0, 0, 1, 1], [], []>} : vector<8x128xf32>, vector<128x256xf32>, vector<8x256xf32> -> vector<8x256xf32>
    %c0_4 = arith.constant 0 : index
    %c0_5 = arith.constant 0 : index
    %4 = vector.load %arg5[%c0_4, %c0_5] : memref<8x1xf32, #tpu.memory_space<vmem>>, vector<8x1xf32>
    %5 = vector.broadcast %4 : vector<8x1xf32> to vector<8x256xf32>
    %6 = arith.addf %3, %5 : vector<8x256xf32>
    %cst_6 = arith.constant 0.000000e+00 : f32
    %7 = vector.broadcast %cst_6 : f32 to vector<8x256xf32>
    %8 = arith.maximumf %6, %7 : vector<8x256xf32>
    %c0_i32 = arith.constant 0 : i32
    %9 = arith.cmpi eq, %arg2, %c0_i32 : i32
    %10 = arith.extui %9 : i1 to i32
    %c0_i32_7 = arith.constant 0 : i32
    %11 = arith.cmpi ne, %10, %c0_i32_7 : i32
    scf.if %11 {
      %c0_10 = arith.constant 0 : index
      %c0_11 = arith.constant 0 : index
      %15 = vector.load %arg6[%c0_10, %c0_11] : memref<8x256xf32, #tpu.memory_space<vmem>>, vector<8x256xf32>
      tpu.vector_store %arg6[%c0_10, %c0_11], %8 {strides = array<i32>} : memref<8x256xf32, #tpu.memory_space<vmem>>, vector<8x256xf32>,
    } else {
    }
    %c0_i32_8 = arith.constant 0 : i32
    %12 = arith.cmpi ne, %arg2, %c0_i32_8 : i32
    %13 = arith.extui %12 : i1 to i32
    %c0_i32_9 = arith.constant 0 : i32
    %14 = arith.cmpi ne, %13, %c0_i32_9 : i32
    scf.if %14 {
      %c0_10 = arith.constant 0 : index
      %c0_11 = arith.constant 0 : index
      %15 = vector.load %arg6[%c0_10, %c0_11] : memref<8x256xf32, #tpu.memory_space<vmem>>, vector<8x256xf32>
      %16 = arith.maximumf %15, %8 : vector<8x256xf32>
      %c0_12 = arith.constant 0 : index
      %c0_13 = arith.constant 0 : index
      %17 = vector.load %arg6[%c0_12, %c0_13] : memref<8x256xf32, #tpu.memory_space<vmem>>, vector<8x256xf32>
      tpu.vector_store %arg6[%c0_12, %c0_13], %16 {strides = array<i32>} : memref<8x256xf32, #tpu.memory_space<vmem>>, vector<8x256xf32>,
    } else {
    }
    return
  }
  func.func @transform_0(%arg0: i32, %arg1: i32, %arg2: i32) -> (i32, i32) {
    %c0_i32 = arith.constant 0 : i32
    %c0_i32_0 = arith.constant 0 : i32
    return %arg0, %c0_i32 : i32, i32
  }
  func.func @transform_1(%arg0: i32, %arg1: i32, %arg2: i32) -> (i32, i32, i32) {
    %c0_i32 = arith.constant 0 : i32
    %c0_i32_0 = arith.constant 0 : i32
    return %arg2, %c0_i32, %arg1 : i32, i32, i32
  }
  func.func @transform_2(%arg0: i32, %arg1: i32, %arg2: i32) -> (i32, i32) {
    %c0_i32 = arith.constant 0 : i32
    %c0_i32_0 = arith.constant 0 : i32
    return %arg0, %c0_i32 : i32, i32
  }
  func.func @transform_3(%arg0: i32, %arg1: i32, %arg2: i32) -> (i32, i32) {
    %c0_i32 = arith.constant 0 : i32
    return %arg0, %arg1 : i32, i32
  }
}

module attributes {stable_mosaic.version = 11 : i64} {
  func.func @_conv_pool_kernel(%arg0: i32, %arg1: i32, %arg2: i32, %arg3: memref<8x256xf32, #tpu.memory_space<vmem>>, %arg4: memref<1x256x128xf32, #tpu.memory_space<vmem>>, %arg5: memref<8x1xf32, #tpu.memory_space<vmem>>, %arg6: memref<8x128xf32, #tpu.memory_space<vmem>>) attributes {dimension_semantics = [#tpu.dimension_semantics<parallel>, #tpu.dimension_semantics<parallel>, #tpu.dimension_semantics<arbitrary>], iteration_bounds = array<i64: 2, 1, 4>, scalar_prefetch = 0 : i64, scratch_operands = 0 : i64, tpu.core_type = #tpu.core_type<tc>, window_params = [{transform_indices = @transform_0, window_bounds = array<i64: 8, 256>}, {transform_indices = @transform_1, window_bounds = array<i64: 1, 256, 128>}, {transform_indices = @transform_2, window_bounds = array<i64: 8, 1>}, {transform_indices = @transform_3, window_bounds = array<i64: 8, 128>}]} {
    %c0 = arith.constant 0 : index
    %c0_0 = arith.constant 0 : index
    %0 = vector.load %arg3[%c0, %c0_0] : memref<8x256xf32, #tpu.memory_space<vmem>>, vector<8x256xf32>
    %c0_1 = arith.constant 0 : index
    %c0_2 = arith.constant 0 : index
    %c0_3 = arith.constant 0 : index
    %1 = vector.load %arg4[%c0_1, %c0_2, %c0_3] : memref<1x256x128xf32, #tpu.memory_space<vmem>>, vector<1x256x128xf32>
    %2 = vector.shape_cast %1 : vector<1x256x128xf32> to vector<256x128xf32>
    %cst = arith.constant dense<0.000000e+00> : vector<8x128xf32>
    %3 = tpu.matmul %0, %2, %cst {dimension_numbers = #tpu.dot_dimension_numbers<[1], [0], [0], [1], [0, 0, 1, 1], [], []>} : vector<8x256xf32>, vector<256x128xf32>, vector<8x128xf32> -> vector<8x128xf32>
    %c0_4 = arith.constant 0 : index
    %c0_5 = arith.constant 0 : index
    %4 = vector.load %arg5[%c0_4, %c0_5] : memref<8x1xf32, #tpu.memory_space<vmem>>, vector<8x1xf32>
    %5 = vector.broadcast %4 : vector<8x1xf32> to vector<8x128xf32>
    %6 = arith.addf %3, %5 : vector<8x128xf32>
    %cst_6 = arith.constant 0.000000e+00 : f32
    %7 = vector.broadcast %cst_6 : f32 to vector<8x128xf32>
    %8 = arith.maximumf %6, %7 : vector<8x128xf32>
    %c0_i32 = arith.constant 0 : i32
    %9 = arith.cmpi eq, %arg2, %c0_i32 : i32
    %10 = arith.extui %9 : i1 to i32
    %c0_i32_7 = arith.constant 0 : i32
    %11 = arith.cmpi ne, %10, %c0_i32_7 : i32
    scf.if %11 {
      %c0_10 = arith.constant 0 : index
      %c0_11 = arith.constant 0 : index
      %15 = vector.load %arg6[%c0_10, %c0_11] : memref<8x128xf32, #tpu.memory_space<vmem>>, vector<8x128xf32>
      tpu.vector_store %arg6[%c0_10, %c0_11], %8 {strides = array<i32>} : memref<8x128xf32, #tpu.memory_space<vmem>>, vector<8x128xf32>,
    } else {
    }
    %c0_i32_8 = arith.constant 0 : i32
    %12 = arith.cmpi ne, %arg2, %c0_i32_8 : i32
    %13 = arith.extui %12 : i1 to i32
    %c0_i32_9 = arith.constant 0 : i32
    %14 = arith.cmpi ne, %13, %c0_i32_9 : i32
    scf.if %14 {
      %c0_10 = arith.constant 0 : index
      %c0_11 = arith.constant 0 : index
      %15 = vector.load %arg6[%c0_10, %c0_11] : memref<8x128xf32, #tpu.memory_space<vmem>>, vector<8x128xf32>
      %16 = arith.maximumf %15, %8 : vector<8x128xf32>
      %c0_12 = arith.constant 0 : index
      %c0_13 = arith.constant 0 : index
      %17 = vector.load %arg6[%c0_12, %c0_13] : memref<8x128xf32, #tpu.memory_space<vmem>>, vector<8x128xf32>
      tpu.vector_store %arg6[%c0_12, %c0_13], %16 {strides = array<i32>} : memref<8x128xf32, #tpu.memory_space<vmem>>, vector<8x128xf32>,
    } else {
    }
    return
  }
  func.func @transform_0(%arg0: i32, %arg1: i32, %arg2: i32) -> (i32, i32) {
    %c0_i32 = arith.constant 0 : i32
    %c0_i32_0 = arith.constant 0 : i32
    return %arg0, %c0_i32 : i32, i32
  }
  func.func @transform_1(%arg0: i32, %arg1: i32, %arg2: i32) -> (i32, i32, i32) {
    %c0_i32 = arith.constant 0 : i32
    %c0_i32_0 = arith.constant 0 : i32
    return %arg2, %c0_i32, %arg1 : i32, i32, i32
  }
  func.func @transform_2(%arg0: i32, %arg1: i32, %arg2: i32) -> (i32, i32) {
    %c0_i32 = arith.constant 0 : i32
    %c0_i32_0 = arith.constant 0 : i32
    return %arg0, %c0_i32 : i32, i32
  }
  func.func @transform_3(%arg0: i32, %arg1: i32, %arg2: i32) -> (i32, i32) {
    %c0_i32 = arith.constant 0 : i32
    return %arg0, %arg1 : i32, i32
  }
}

module attributes {stable_mosaic.version = 11 : i64} {
  func.func @_fc_fused_kernel(%arg0: i32, %arg1: memref<8x400xf32, #tpu.memory_space<vmem>>, %arg2: memref<400x128xf32, #tpu.memory_space<vmem>>, %arg3: memref<1x128xf32, #tpu.memory_space<vmem>>, %arg4: memref<128x128xf32, #tpu.memory_space<vmem>>, %arg5: memref<1x128xf32, #tpu.memory_space<vmem>>, %arg6: memref<128x128xf32, #tpu.memory_space<vmem>>, %arg7: memref<1x128xf32, #tpu.memory_space<vmem>>, %arg8: memref<8x128xf32, #tpu.memory_space<vmem>>) attributes {dimension_semantics = [#tpu.dimension_semantics<parallel>], iteration_bounds = array<i64: 1>, scalar_prefetch = 0 : i64, scratch_operands = 0 : i64, tpu.core_type = #tpu.core_type<tc>, window_params = [{transform_indices = @transform_0, window_bounds = array<i64: 8, 400>}, {pipeline_mode = #tpu.pipeline_mode<synchronous>, transform_indices = @transform_1, window_bounds = array<i64: 400, 128>}, {pipeline_mode = #tpu.pipeline_mode<synchronous>, transform_indices = @transform_2, window_bounds = array<i64: 1, 128>}, {pipeline_mode = #tpu.pipeline_mode<synchronous>, transform_indices = @transform_3, window_bounds = array<i64: 128, 128>}, {pipeline_mode = #tpu.pipeline_mode<synchronous>, transform_indices = @transform_4, window_bounds = array<i64: 1, 128>}, {pipeline_mode = #tpu.pipeline_mode<synchronous>, transform_indices = @transform_5, window_bounds = array<i64: 128, 128>}, {pipeline_mode = #tpu.pipeline_mode<synchronous>, transform_indices = @transform_6, window_bounds = array<i64: 1, 128>}, {transform_indices = @transform_7, window_bounds = array<i64: 8, 128>}]} {
    %c0 = arith.constant 0 : index
    %c0_0 = arith.constant 0 : index
    %0 = vector.load %arg1[%c0, %c0_0] : memref<8x400xf32, #tpu.memory_space<vmem>>, vector<8x400xf32>
    %c0_1 = arith.constant 0 : index
    %c0_2 = arith.constant 0 : index
    %1 = vector.load %arg2[%c0_1, %c0_2] : memref<400x128xf32, #tpu.memory_space<vmem>>, vector<400x128xf32>
    %cst = arith.constant dense<0.000000e+00> : vector<8x128xf32>
    %2 = tpu.matmul %0, %1, %cst {dimension_numbers = #tpu.dot_dimension_numbers<[1], [0], [0], [1], [0, 0, 1, 1], [], []>} : vector<8x400xf32>, vector<400x128xf32>, vector<8x128xf32> -> vector<8x128xf32>
    %c0_3 = arith.constant 0 : index
    %c0_4 = arith.constant 0 : index
    %3 = vector.load %arg3[%c0_3, %c0_4] : memref<1x128xf32, #tpu.memory_space<vmem>>, vector<1x128xf32>
    %4 = vector.broadcast %3 : vector<1x128xf32> to vector<8x128xf32>
    %5 = arith.addf %2, %4 : vector<8x128xf32>
    %cst_5 = arith.constant 0.000000e+00 : f32
    %6 = vector.broadcast %cst_5 : f32 to vector<8x128xf32>
    %7 = arith.maximumf %5, %6 : vector<8x128xf32>
    %c0_6 = arith.constant 0 : index
    %c0_7 = arith.constant 0 : index
    %8 = vector.load %arg4[%c0_6, %c0_7] : memref<128x128xf32, #tpu.memory_space<vmem>>, vector<128x128xf32>
    %cst_8 = arith.constant dense<0.000000e+00> : vector<8x128xf32>
    %9 = tpu.matmul %7, %8, %cst_8 {dimension_numbers = #tpu.dot_dimension_numbers<[1], [0], [0], [1], [0, 0, 1, 1], [], []>} : vector<8x128xf32>, vector<128x128xf32>, vector<8x128xf32> -> vector<8x128xf32>
    %c0_9 = arith.constant 0 : index
    %c0_10 = arith.constant 0 : index
    %10 = vector.load %arg5[%c0_9, %c0_10] : memref<1x128xf32, #tpu.memory_space<vmem>>, vector<1x128xf32>
    %11 = vector.broadcast %10 : vector<1x128xf32> to vector<8x128xf32>
    %12 = arith.addf %9, %11 : vector<8x128xf32>
    %cst_11 = arith.constant 0.000000e+00 : f32
    %13 = vector.broadcast %cst_11 : f32 to vector<8x128xf32>
    %14 = arith.maximumf %12, %13 : vector<8x128xf32>
    %c0_12 = arith.constant 0 : index
    %c0_13 = arith.constant 0 : index
    %15 = vector.load %arg6[%c0_12, %c0_13] : memref<128x128xf32, #tpu.memory_space<vmem>>, vector<128x128xf32>
    %cst_14 = arith.constant dense<0.000000e+00> : vector<8x128xf32>
    %16 = tpu.matmul %14, %15, %cst_14 {dimension_numbers = #tpu.dot_dimension_numbers<[1], [0], [0], [1], [0, 0, 1, 1], [], []>} : vector<8x128xf32>, vector<128x128xf32>, vector<8x128xf32> -> vector<8x128xf32>
    %c0_15 = arith.constant 0 : index
    %c0_16 = arith.constant 0 : index
    %17 = vector.load %arg7[%c0_15, %c0_16] : memref<1x128xf32, #tpu.memory_space<vmem>>, vector<1x128xf32>
    %18 = vector.broadcast %17 : vector<1x128xf32> to vector<8x128xf32>
    %19 = arith.addf %16, %18 : vector<8x128xf32>
    %c0_17 = arith.constant 0 : index
    %c0_18 = arith.constant 0 : index
    %20 = vector.load %arg8[%c0_17, %c0_18] : memref<8x128xf32, #tpu.memory_space<vmem>>, vector<8x128xf32>
    tpu.vector_store %arg8[%c0_17, %c0_18], %19 {strides = array<i32>} : memref<8x128xf32, #tpu.memory_space<vmem>>, vector<8x128xf32>,
    return
  }
  func.func @transform_0(%arg0: i32) -> (i32, i32) {
    %c0_i32 = arith.constant 0 : i32
    %c0_i32_0 = arith.constant 0 : i32
    return %arg0, %c0_i32 : i32, i32
  }
  func.func @transform_1(%arg0: i32) -> (i32, i32) {
    %c0_i32 = arith.constant 0 : i32
    %c0_i32_0 = arith.constant 0 : i32
    %c0_i32_1 = arith.constant 0 : i32
    return %c0_i32, %c0_i32_0 : i32, i32
  }
  func.func @transform_2(%arg0: i32) -> (i32, i32) {
    %c0_i32 = arith.constant 0 : i32
    %c0_i32_0 = arith.constant 0 : i32
    %c0_i32_1 = arith.constant 0 : i32
    return %c0_i32, %c0_i32_0 : i32, i32
  }
  func.func @transform_3(%arg0: i32) -> (i32, i32) {
    %c0_i32 = arith.constant 0 : i32
    %c0_i32_0 = arith.constant 0 : i32
    %c0_i32_1 = arith.constant 0 : i32
    return %c0_i32, %c0_i32_0 : i32, i32
  }
  func.func @transform_4(%arg0: i32) -> (i32, i32) {
    %c0_i32 = arith.constant 0 : i32
    %c0_i32_0 = arith.constant 0 : i32
    %c0_i32_1 = arith.constant 0 : i32
    return %c0_i32, %c0_i32_0 : i32, i32
  }
  func.func @transform_5(%arg0: i32) -> (i32, i32) {
    %c0_i32 = arith.constant 0 : i32
    %c0_i32_0 = arith.constant 0 : i32
    %c0_i32_1 = arith.constant 0 : i32
    return %c0_i32, %c0_i32_0 : i32, i32
  }
  func.func @transform_6(%arg0: i32) -> (i32, i32) {
    %c0_i32 = arith.constant 0 : i32
    %c0_i32_0 = arith.constant 0 : i32
    %c0_i32_1 = arith.constant 0 : i32
    return %c0_i32, %c0_i32_0 : i32, i32
  }
  func.func @transform_7(%arg0: i32) -> (i32, i32) {
    %c0_i32 = arith.constant 0 : i32
    %c0_i32_0 = arith.constant 0 : i32
    return %arg0, %c0_i32 : i32, i32
  }
}

</mosaic_0001>

<llo_original>
// kernel: net_forward.3
$region0: #{net_forward.3}
  #allocation0 [shape = 'u32[]', space=smem, size = 0x4, offset = 0x4, fixed_abs, tag = 'smem constant byte address 0x4 - core index']
  #allocation1 [shape = 'u32[144,128]{1,0:T(1,128)}', space=vmem, size = 0x12000, scoped, tag = 'internal scratch']
  %s0 = inlined_call_operand.vmem [shape: f32[8,128], index: 0, kind: input, shape index: {}]
  %s1 = inlined_call_operand.vmem [shape: f32[4,128,512], index: 1, kind: input, shape index: {}]
  %s2 = inlined_call_operand.vmem [shape: f32[8,1], index: 2, kind: input, shape index: {}]
  %s3 = inlined_call_operand.vmem [shape: f32[8,512], index: 3, kind: output, shape index: {}]
  %s4 = sld [smem:[#allocation0]]
  $region76: #{net_forward.3} parent=0
    _
  %s6 = ssub.s32 1, %s4
  %s7 = scalar_select 0, %s6, %s4
  $region1: #{net_forward.3} parent=0
    #allocation2 [shape = 'u8[262144]{0}', space=vmem, size = 0x40000, scoped, tag = 'input window, operand 1']
    loop: start=0, step=1, limit=10
    $region2: #{net_forward.3} parent=1 // loop_pre_header
      _
    $region3: #{net_forward.3} parent=1 // loop_header
      %s9 = sphi 0, %s13
      %p10 = scmp.ge.s32.totalorder %s9, 10
      %s16 = sphi 0, %s35
      %s17 = sphi 0, %s31
      %s18 = sphi 0, %s27
      %s19 = sphi 0, %s16
      %s20 = sphi 0, %s17
      %s21 = sphi 0, %s18
      %s22 = sphi 0, %s19
      %s23 = sphi 0, %s20
      %s24 = sphi 0, %s21
      %s38 = sphi 0, %s40
      %s41 = sphi 0, %s38
      %s42 = sphi 0, %s41
      %s58 = sphi 0, %s42
      %s66 = sphi 0, %s68
      %s69 = sphi 0, %s66
      %s70 = sphi 0, %s69
      %s86 = sphi 0, %s70
      %s92 = sphi 0, %s94
      %s95 = sphi 0, %s92
      %s96 = sphi 0, %s95
      %s112 = sphi 0, %s96
      %s120 = sphi 0, %s122
      %s123 = sphi 0, %s120
      %s124 = sphi 0, %s123
      %s140 = sphi 0, %s124
    $region4: #{net_forward.3} parent=1 // loop_header_branch
      %12 = sbr.rel (%p10) target = $region8
    $region5: #{net_forward.3} parent=1 // loop_body
      %s14 = ssub.s32 %s9, 1
      %s15 = ssub.s32 %s9, 2
      %s25 = sadd.s32 1, %s18
      %p26 = scmp.ge.s32.totalorder %s25, 4
      %s27 = scalar_select %p26, 0, %s25
      %s28 = sadd.s32 1, %s17
      %s29 = scalar_select %p26, %s28, %s17
      %p30 = scmp.ge.s32.totalorder %s29, 2
      %s31 = scalar_select %p30, 0, %s29
      %s32 = sadd.s32 1, %s16
      %s33 = scalar_select %p30, %s32, %s16
      %p34 = scmp.ge.s32.totalorder %s33, 1
      %s35 = scalar_select %p34, 0, %s33
      %s36 = ssub.s32 %s16, %s35
      %p37 = scmp.eq.s32.totalorder %s36, 0
      %s39 = sadd.s32 %s38, 1
      %s40 = scalar_select %p37, %s38, %s39
      %p43 = pneg %p37
      %p44 = scmp.eq.s32.totalorder %s9, 7
      %p45 = por %p43, %p44
      %p46 = scmp.ne.s32.totalorder %s38, %s41
      %p47 = scmp.eq.s32.totalorder %s9, 0
      %p48 = por %p46, %p47
      %p49 = scmp.ne.s32.totalorder %s38, %s41
      %p50 = scmp.eq.s32.totalorder %s14, 7
      %p51 = por %p49, %p50
      %p52 = scmp.ne.s32.totalorder %s41, %s42
      %p53 = scmp.eq.s32.totalorder %s14, 0
      %p54 = por %p52, %p53
      %p55 = scmp.ne.s32.totalorder %s41, %s42
      %p56 = scmp.eq.s32.totalorder %s15, 7
      %p57 = por %p55, %p56
      %p59 = scmp.ne.s32.totalorder %s42, %s58
      %p60 = scmp.eq.s32.totalorder %s15, 0
      %p61 = por %p59, %p60
      %s62 = ssub.s32 %s18, %s27
      %s63 = ssub.s32 %s17, %s31
      %s64 = sor.u32 %s62, %s63
      %p65 = scmp.eq.s32.totalorder %s64, 0
      %s67 = sadd.s32 %s66, 1
      %s68 = scalar_select %p65, %s66, %s67
      %p71 = pneg %p65
      %p72 = scmp.eq.s32.totalorder %s9, 7
      %p73 = por %p71, %p72
      %p74 = scmp.ne.s32.totalorder %s66, %s69
      %p75 = scmp.eq.s32.totalorder %s9, 0
      %p76 = por %p74, %p75
      %p77 = scmp.ne.s32.totalorder %s66, %s69
      %p78 = scmp.eq.s32.totalorder %s14, 7
      %p79 = por %p77, %p78
      %p80 = scmp.ne.s32.totalorder %s69, %s70
      %p81 = scmp.eq.s32.totalorder %s14, 0
      %p82 = por %p80, %p81
      %p83 = scmp.ne.s32.totalorder %s69, %s70
      %p84 = scmp.eq.s32.totalorder %s15, 7
      %p85 = por %p83, %p84
      %p87 = scmp.ne.s32.totalorder %s70, %s86
      %p88 = scmp.eq.s32.totalorder %s15, 0
      %p89 = por %p87, %p88
      %s90 = ssub.s32 %s16, %s35
      %p91 = scmp.eq.s32.totalorder %s90, 0
      %s93 = sadd.s32 %s92, 1
      %s94 = scalar_select %p91, %s92, %s93
      %p97 = pneg %p91
      %p98 = scmp.eq.s32.totalorder %s9, 7
      %p99 = por %p97, %p98
      %p100 = scmp.ne.s32.totalorder %s92, %s95
      %p101 = scmp.eq.s32.totalorder %s9, 0
      %p102 = por %p100, %p101
      %p103 = scmp.ne.s32.totalorder %s92, %s95
      %p104 = scmp.eq.s32.totalorder %s14, 7
      %p105 = por %p103, %p104
      %p106 = scmp.ne.s32.totalorder %s95, %s96
      %p107 = scmp.eq.s32.totalorder %s14, 0
      %p108 = por %p106, %p107
      %p109 = scmp.ne.s32.totalorder %s95, %s96
      %p110 = scmp.eq.s32.totalorder %s15, 7
      %p111 = por %p109, %p110
      %p113 = scmp.ne.s32.totalorder %s96, %s112
      %p114 = scmp.eq.s32.totalorder %s15, 0
      %p115 = por %p113, %p114
      %s116 = ssub.s32 %s16, %s35
      %s117 = ssub.s32 %s17, %s31
      %s118 = sor.u32 %s116, %s117
      %p119 = scmp.eq.s32.totalorder %s118, 0
      %s121 = sadd.s32 %s120, 1
      %s122 = scalar_select %p119, %s120, %s121
      %p125 = pneg %p119
      %p126 = scmp.eq.s32.totalorder %s9, 7
      %p127 = por %p125, %p126
      %p128 = scmp.ne.s32.totalorder %s120, %s123
      %p129 = scmp.eq.s32.totalorder %s9, 0
      %p130 = por %p128, %p129
      %p131 = scmp.ne.s32.totalorder %s120, %s123
      %p132 = scmp.eq.s32.totalorder %s14, 7
      %p133 = por %p131, %p132
      %p134 = scmp.ne.s32.totalorder %s123, %s124
      %p135 = scmp.eq.s32.totalorder %s14, 0
      %p136 = por %p134, %p135
      %p137 = scmp.ne.s32.totalorder %s123, %s124
      %p138 = scmp.eq.s32.totalorder %s15, 7
      %p139 = por %p137, %p138
      %p141 = scmp.ne.s32.totalorder %s124, %s140
      %p142 = scmp.eq.s32.totalorder %s15, 0
      %p143 = por %p141, %p142
      %p144 = scmp.le.s32.totalorder 1, %s9
      %p145 = scmp.lt.s32.totalorder %s9, 9
      %p146 = pnand %p144, %p145
      %p147 = pneg %p146
      // Predicated region
      $region9: #{net_forward.3} parent=5 // pred_check
        _
      $region10: #{net_forward.3} parent=5 // pred_check_branch
        %149 = sbr.rel (%p146) target = $region12
      $region11: #{net_forward.3} parent=5 // pred_region
        %s150 = ssub.s32 %s9, 1
        // Predicated region
        $region13: #{net_forward.3} parent=11 // pred_check
          %p151 = pneg %p54
        $region14: #{net_forward.3} parent=11 // pred_check_branch
          %153 = sbr.rel (%p151) target = $region16
        $region15: #{net_forward.3} parent=11 // pred_region
          %p154 = scmp.lt.s32.totalorder %s19, 0
          %s155 = scalar_select %p154, %s19, 0
          %s156 = smul.addr %s155, 8
          %s157 = scalar_lea.vmem %s0, %s156
        $region16: #{net_forward.3} parent=11 // pred_fallthru
          _
        // Predicated region
        $region17: #{net_forward.3} parent=11 // pred_check
          %p158 = pneg %p108
        $region18: #{net_forward.3} parent=11 // pred_check_branch
          %160 = sbr.rel (%p158) target = $region20
        $region19: #{net_forward.3} parent=11 // pred_region
          %p161 = scmp.lt.s32.totalorder %s19, 0
          %s162 = scalar_select %p161, %s19, 0
          %s163 = smul.addr %s162, 8
          %s164 = scalar_lea.vmem %s2, %s163
        $region20: #{net_forward.3} parent=11 // pred_fallthru
          _
      $region12: #{net_forward.3} parent=5 // pred_fallthru
        _
      %p165 = scmp.lt.s32.totalorder %s9, 8
      // Predicated region
      $region21: #{net_forward.3} parent=5 // pred_check
        %p166 = pneg %p165
      $region22: #{net_forward.3} parent=5 // pred_check_branch
        %168 = sbr.rel (%p166) target = $region24
      $region23: #{net_forward.3} parent=5 // pred_region
        // Predicated region
        $region25: #{net_forward.3} parent=23 // pred_check
          %p169 = pneg %p76
        $region26: #{net_forward.3} parent=23 // pred_check_branch
          %171 = sbr.rel (%p169) target = $region28
        $region27: #{net_forward.3} parent=23 // pred_region
          %s172 = sand.u32 %s66, 1
          %s173 = sand.u32 %s66, 1
          %s174 = smul.addr %s173, 256
          %s175 = scalar_lea.vmem [#allocation2], %s174
          %s176 = smul.u32 2, %s17
          %s177 = smul.addr %s18, 64
          %s178 = sadd.s32 %s176, %s177
          %s179 = smul.addr %s178, 8
          %s180 = scalar_lea.vmem %s1, %s179
          // Predicated region
          $region29: #{net_forward.3} parent=27 // pred_check
            _
          $region30: #{net_forward.3} parent=27 // pred_check_branch
            %182 = sbr.rel (0) target = $region32
          $region31: #{net_forward.3} parent=27 // pred_region
            // Predicated region
            $region33: #{net_forward.3} parent=31 // pred_check
              _
            $region34: #{net_forward.3} parent=31 // pred_check_branch
              %184 = sbr.rel (0) target = $region36
            $region35: #{net_forward.3} parent=31 // pred_region
              loop: start=0, step=1, limit=1
              $region37: #{net_forward.3} parent=35 // loop_pre_header
                _
              $region38: #{net_forward.3} parent=35 // loop_header
                %s186 = sphi 0, %s190
                %p187 = scmp.ge.s32.totalorder %s186, 1
                %s191 = sphi %s180, %s180
                %s192 = sphi %s175, %s175
              $region39: #{net_forward.3} parent=35 // loop_header_branch
                %189 = sbr.rel (%p187) target = $region43
              $region40: #{net_forward.3} parent=35 // loop_body
                %v193 = vld [vmem:[%s191] sm:$0xff]
                %194 = vst [vmem:[%s192] sm:$0xff] %v193
                %v195 = vld [vmem:[%s191 + $0x8] sm:$0xff]
                %196 = vst [vmem:[%s192 + $0x8] sm:$0xff] %v195
                %v197 = vld [vmem:[%s191 + $0x20] sm:$0xff]
                %198 = vst [vmem:[%s192 + $0x10] sm:$0xff] %v197
                %v199 = vld [vmem:[%s191 + $0x28] sm:$0xff]
                %200 = vst [vmem:[%s192 + $0x18] sm:$0xff] %v199
                %v201 = vld [vmem:[%s191 + $0x40] sm:$0xff]
                %202 = vst [vmem:[%s192 + $0x20] sm:$0xff] %v201
                %v203 = vld [vmem:[%s191 + $0x48] sm:$0xff]
                %204 = vst [vmem:[%s192 + $0x28] sm:$0xff] %v203
                %v205 = vld [vmem:[%s191 + $0x60] sm:$0xff]
                %206 = vst [vmem:[%s192 + $0x30] sm:$0xff] %v205
                %v207 = vld [vmem:[%s191 + $0x68] sm:$0xff]
                %208 = vst [vmem:[%s192 + $0x38] sm:$0xff] %v207
                %v209 = vld [vmem:[%s191 + $0x80] sm:$0xff]
                %210 = vst [vmem:[%s192 + $0x40] sm:$0xff] %v209
                %v211 = vld [vmem:[%s191 + $0x88] sm:$0xff]
                %212 = vst [vmem:[%s192 + $0x48] sm:$0xff] %v211
                %v213 = vld [vmem:[%s191 + $0xa0] sm:$0xff]
                %214 = vst [vmem:[%s192 + $0x50] sm:$0xff] %v213
                %v215 = vld [vmem:[%s191 + $0xa8] sm:$0xff]
                %216 = vst [vmem:[%s192 + $0x58] sm:$0xff] %v215
                %v217 = vld [vmem:[%s191 + $0xc0] sm:$0xff]
                %218 = vst [vmem:[%s192 + $0x60] sm:$0xff] %v217
                %v219 = vld [vmem:[%s191 + $0xc8] sm:$0xff]
                %220 = vst [vmem:[%s192 + $0x68] sm:$0xff] %v219
                %v221 = vld [vmem:[%s191 + $0xe0] sm:$0xff]
                %222 = vst [vmem:[%s192 + $0x70] sm:$0xff] %v221
                %v223 = vld [vmem:[%s191 + $0xe8] sm:$0xff]
                %224 = vst [vmem:[%s192 + $0x78] sm:$0xff] %v223
                %v225 = vld [vmem:[%s191 + $0x100] sm:$0xff]
                %226 = vst [vmem:[%s192 + $0x80] sm:$0xff] %v225
                %v227 = vld [vmem:[%s191 + $0x108] sm:$0xff]
                %228 = vst [vmem:[%s192 + $0x88] sm:$0xff] %v227
                %v229 = vld [vmem:[%s191 + $0x120] sm:$0xff]
                %230 = vst [vmem:[%s192 + $0x90] sm:$0xff] %v229
                %v231 = vld [vmem:[%s191 + $0x128] sm:$0xff]
                %232 = vst [vmem:[%s192 + $0x98] sm:$0xff] %v231
                %v233 = vld [vmem:[%s191 + $0x140] sm:$0xff]
                %234 = vst [vmem:[%s192 + $0xa0] sm:$0xff] %v233
                %v235 = vld [vmem:[%s191 + $0x148] sm:$0xff]
                %236 = vst [vmem:[%s192 + $0xa8] sm:$0xff] %v235
                %v237 = vld [vmem:[%s191 + $0x160] sm:$0xff]
                %238 = vst [vmem:[%s192 + $0xb0] sm:$0xff] %v237
                %v239 = vld [vmem:[%s191 + $0x168] sm:$0xff]
                %240 = vst [vmem:[%s192 + $0xb8] sm:$0xff] %v239
                %v241 = vld [vmem:[%s191 + $0x180] sm:$0xff]
                %242 = vst [vmem:[%s192 + $0xc0] sm:$0xff] %v241
                %v243 = vld [vmem:[%s191 + $0x188] sm:$0xff]
                %244 = vst [vmem:[%s192 + $0xc8] sm:$0xff] %v243
                %v245 = vld [vmem:[%s191 + $0x1a0] sm:$0xff]
                %246 = vst [vmem:[%s192 + $0xd0] sm:$0xff] %v245
                %v247 = vld [vmem:[%s191 + $0x1a8] sm:$0xff]
                %248 = vst [vmem:[%s192 + $0xd8] sm:$0xff] %v247
                %v249 = vld [vmem:[%s191 + $0x1c0] sm:$0xff]
                %250 = vst [vmem:[%s192 + $0xe0] sm:$0xff] %v249
                %v251 = vld [vmem:[%s191 + $0x1c8] sm:$0xff]
                %252 = vst [vmem:[%s192 + $0xe8] sm:$0xff] %v251
                %v253 = vld [vmem:[%s191 + $0x1e0] sm:$0xff]
                %254 = vst [vmem:[%s192 + $0xf0] sm:$0xff] %v253
                %v255 = vld [vmem:[%s191 + $0x1e8] sm:$0xff]
                %256 = vst [vmem:[%s192 + $0xf8] sm:$0xff] %v255
              $region41: #{net_forward.3} parent=35 // loop_footer
                %s190 = sadd.s32 1, %s186
              $region42: #{net_forward.3} parent=35 // loop_footer_branch
                %185 = sbr.rel target = $region38
              $region43: #{net_forward.3} parent=35 // loop_exit
                _
            $region36: #{net_forward.3} parent=31 // pred_fallthru
              _
            // Predicated region
            $region44: #{net_forward.3} parent=31 // pred_check
              _
            $region45: #{net_forward.3} parent=31 // pred_check_branch
              %258 = sbr.rel target = $region47
            $region46: #{net_forward.3} parent=31 // pred_region
              _
            $region47: #{net_forward.3} parent=31 // pred_fallthru
              _
          $region32: #{net_forward.3} parent=27 // pred_fallthru
            _
          %259 = vnop
        $region28: #{net_forward.3} parent=23 // pred_fallthru
          _
      $region24: #{net_forward.3} parent=5 // pred_fallthru
        _
      %p260 = scmp.le.s32.totalorder 1, %s9
      %p261 = scmp.lt.s32.totalorder %s9, 9
      %p262 = pnand %p260, %p261
      %p263 = pneg %p262
      // Predicated region
      $region48: #{net_forward.3} parent=5 // pred_check
        _
      $region49: #{net_forward.3} parent=5 // pred_check_branch
        %265 = sbr.rel (%p262) target = $region51
      $region50: #{net_forward.3} parent=5 // pred_region
        %s266 = ssub.s32 %s9, 1
        %s267 = sand.u32 %s69, 1
        %s268 = sand.u32 %s69, 1
        %s269 = smul.addr %s268, 256
        %s270 = scalar_lea.vmem [#allocation2], %s269
        // Predicated region
        $region52: #{net_forward.3} parent=50 // pred_check
          %p271 = pneg %p82
        $region53: #{net_forward.3} parent=50 // pred_check_branch
          %273 = sbr.rel (%p271) target = $region55
        $region54: #{net_forward.3} parent=50 // pred_region
          _
        $region55: #{net_forward.3} parent=50 // pred_fallthru
          _
        %p274 = scmp.lt.s32.totalorder %s19, 0
        %s275 = scalar_select %p274, %s19, 0
        %s276 = smul.addr %s275, 8
        %s277 = scalar_lea.vmem %s0, %s276
        %p278 = pneg %p54
        %p279 = pneg %p51
        %s280 = sand.u32 %s69, 1
        %s281 = sand.u32 %s69, 1
        %s282 = smul.addr %s281, 256
        %s283 = scalar_lea.vmem [#allocation2], %s282
        %p284 = pneg %p82
        %p285 = pneg %p79
        %p286 = scmp.lt.s32.totalorder %s19, 0
        %s287 = scalar_select %p286, %s19, 0
        %s288 = smul.addr %s287, 8
        %s289 = scalar_lea.vmem %s2, %s288
        %p290 = pneg %p108
        %p291 = pneg %p105
        %p292 = pneg %p136
        %p293 = pneg %p133
        %s294 = smul.u32 2, %s20
        %p295 = scmp.lt.s32.totalorder %s19, 0
        %s296 = scalar_select %p295, %s19, 0
        %p297 = scmp.lt.s32.totalorder %s294, 3
        %s298 = scalar_select %p297, %s294, 3
        %s299 = smul.addr %s296, 4
        %s300 = sadd.s32 %s298, %s299
        %s301 = smul.addr %s300, 8
        %s302 = scalar_lea.vmem %s3, %s301
        %p303 = scmp.lt.s32.totalorder %s19, 0
        %s304 = scalar_select %p303, %s19, 0
        %s305 = smul.addr %s304, 8
        %s306 = scalar_lea.vmem %s0, %s305
        %s307 = smul.u32 2, %s20
        %p308 = scmp.lt.s32.totalorder %s19, 0
        %s309 = scalar_select %p308, %s19, 0
        %s310 = smul.addr %s309, 8
        %s311 = scalar_lea.vmem %s2, %s310
        %s312 = smul.u32 2, %s20
        %p313 = scmp.lt.s32.totalorder %s19, 0
        %s314 = scalar_select %p313, %s19, 0
        %p315 = scmp.lt.s32.totalorder %s312, 3
        %s316 = scalar_select %p315, %s312, 3
        %s317 = smul.addr %s314, 4
        %s318 = sadd.s32 %s316, %s317
        %s319 = smul.addr %s318, 8
        %s320 = scalar_lea.vmem %s3, %s319
        %s321 = smul.u32 2, %s20
        %v322 = vld [vmem:[%s306] sm:$0xff]
        %v323 = vld [vmem:[%s270] sm:$0xff]
        %v324 = vld [vmem:[%s270 + $0x8] sm:$0xff]
        %v325 = vld [vmem:[%s270 + $0x10] sm:$0xff]
        %v326 = vld [vmem:[%s270 + $0x18] sm:$0xff]
        %v327 = vld [vmem:[%s270 + $0x20] sm:$0xff]
        %v328 = vld [vmem:[%s270 + $0x28] sm:$0xff]
        %v329 = vld [vmem:[%s270 + $0x30] sm:$0xff]
        %v330 = vld [vmem:[%s270 + $0x38] sm:$0xff]
        %v331 = vld [vmem:[%s270 + $0x40] sm:$0xff]
        %v332 = vld [vmem:[%s270 + $0x48] sm:$0xff]
        %v333 = vld [vmem:[%s270 + $0x50] sm:$0xff]
        %v334 = vld [vmem:[%s270 + $0x58] sm:$0xff]
        %v335 = vld [vmem:[%s270 + $0x60] sm:$0xff]
        %v336 = vld [vmem:[%s270 + $0x68] sm:$0xff]
        %v337 = vld [vmem:[%s270 + $0x70] sm:$0xff]
        %v338 = vld [vmem:[%s270 + $0x78] sm:$0xff]
        %v339 = vld [vmem:[%s270 + $0x80] sm:$0xff]
        %v340 = vld [vmem:[%s270 + $0x88] sm:$0xff]
        %v341 = vld [vmem:[%s270 + $0x90] sm:$0xff]
        %v342 = vld [vmem:[%s270 + $0x98] sm:$0xff]
        %v343 = vld [vmem:[%s270 + $0xa0] sm:$0xff]
        %v344 = vld [vmem:[%s270 + $0xa8] sm:$0xff]
        %v345 = vld [vmem:[%s270 + $0xb0] sm:$0xff]
        %v346 = vld [vmem:[%s270 + $0xb8] sm:$0xff]
        %v347 = vld [vmem:[%s270 + $0xc0] sm:$0xff]
        %v348 = vld [vmem:[%s270 + $0xc8] sm:$0xff]
        %v349 = vld [vmem:[%s270 + $0xd0] sm:$0xff]
        %v350 = vld [vmem:[%s270 + $0xd8] sm:$0xff]
        %v351 = vld [vmem:[%s270 + $0xe0] sm:$0xff]
        %v352 = vld [vmem:[%s270 + $0xe8] sm:$0xff]
        %v353 = vld [vmem:[%s270 + $0xf0] sm:$0xff]
        %v354 = vld [vmem:[%s270 + $0xf8] sm:$0xff]
        %v355 = vld [vmem:[%s311] sm:$0xff]
        %357 = vset.pattern.permute.xlu0 0
        %358 = vperm.xlu0 %357, %v355
        %v359 = vpop.permute.xlu0 %358
        %361 = vmatprep.subr.mxu0 %v324
        %362 = vmatpush1.msra.mxu0 %v323
        %363 = vmatprep.subr.mxu0 %v326
        %364 = vmatpush1.msra.mxu0 %v325
        %365 = vmatprep.subr.mxu0 %v328
        %366 = vmatpush1.msra.mxu0 %v327
        %367 = vmatprep.subr.mxu0 %v330
        %368 = vmatpush1.msra.mxu0 %v329
        %369 = vmatprep.subr.mxu0 %v332
        %370 = vmatpush1.msra.mxu0 %v331
        %371 = vmatprep.subr.mxu0 %v334
        %372 = vmatpush1.msra.mxu0 %v333
        %373 = vmatprep.subr.mxu0 %v336
        %374 = vmatpush1.msra.mxu0 %v335
        %375 = vmatprep.subr.mxu0 %v338
        %376 = vmatpush1.msra.mxu0 %v337
        %377 = vmatprep.subr.mxu0 %v340
        %378 = vmatpush1.msra.mxu0 %v339
        %379 = vmatprep.subr.mxu0 %v342
        %380 = vmatpush1.msra.mxu0 %v341
        %381 = vmatprep.subr.mxu0 %v344
        %382 = vmatpush1.msra.mxu0 %v343
        %383 = vmatprep.subr.mxu0 %v346
        %384 = vmatpush1.msra.mxu0 %v345
        %385 = vmatprep.subr.mxu0 %v348
        %386 = vmatpush1.msra.mxu0 %v347
        %387 = vmatprep.subr.mxu0 %v350
        %388 = vmatpush1.msra.mxu0 %v349
        %389 = vmatprep.subr.mxu0 %v352
        %390 = vmatpush1.msra.mxu0 %v351
        %391 = vmatprep.subr.mxu0 %v354
        %392 = vmatpush1.msra.mxu0 %v353
        %393 = vmatprep.subr.mxu0 0.0
        %394 = vmatpush1.msra.mxu0 0.0
        %395 = vmatprep.subr.mxu0 0.0
        %396 = vmatpush1.msra.mxu0 0.0
        %397 = vmatprep.subr.mxu0 0.0
        %398 = vmatpush1.msra.mxu0 0.0
        %399 = vmatprep.subr.mxu0 0.0
        %400 = vmatpush1.msra.mxu0 0.0
        %401 = vmatprep.subr.mxu0 0.0
        %402 = vmatpush1.msra.mxu0 0.0
        %403 = vmatprep.subr.mxu0 0.0
        %404 = vmatpush1.msra.mxu0 0.0
        %405 = vmatprep.subr.mxu0 0.0
        %406 = vmatpush1.msra.mxu0 0.0
        %407 = vmatprep.subr.mxu0 0.0
        %408 = vmatpush1.msra.mxu0 0.0
        %409 = vmatprep.subr.mxu0 0.0
        %410 = vmatpush1.msra.mxu0 0.0
        %411 = vmatprep.subr.mxu0 0.0
        %412 = vmatpush1.msra.mxu0 0.0
        %413 = vmatprep.subr.mxu0 0.0
        %414 = vmatpush1.msra.mxu0 0.0
        %415 = vmatprep.subr.mxu0 0.0
        %416 = vmatpush1.msra.mxu0 0.0
        %417 = vmatprep.subr.mxu0 0.0
        %418 = vmatpush1.msra.mxu0 0.0
        %419 = vmatprep.subr.mxu0 0.0
        %420 = vmatpush1.msra.mxu0 0.0
        %421 = vmatprep.subr.mxu0 0.0
        %422 = vmatpush1.msra.mxu0 0.0
        %423 = vmatprep.subr.mxu0 0.0
        %424 = vmatpush1.msra.mxu0 0.0
        %425 = vmatprep.mubr.f32.mxu0 0.0
        %426 = vmatmul.mubr.f32.gmra.mrb[0].mxu0 %v322
        %v427 = vpop.f32.mrb[0].mxu0
        %v428 = vadd.f32 %v359, %v427
        %v429 = vpop.f32.mrb[0].mxu0
        %v430 = vadd.f32 %v359, %v429
        %431 = vdwg.mxu0
        %v432 = vmax.f32 %v428, 0.0
        %v433 = vmax.f32 %v430, 0.0
        %p434 = scmp.eq.s32.totalorder %s21, 0
        // Predicated region
        $region56: #{net_forward.3} parent=50 // pred_check
          %p435 = pneg %p434
        $region57: #{net_forward.3} parent=50 // pred_check_branch
          %437 = sbr.rel (%p435) target = $region59
        $region58: #{net_forward.3} parent=50 // pred_region
          %438 = vst [vmem:[%s320] sm:$0xff] %v432
          %439 = vst [vmem:[%s320 + $0x8] sm:$0xff] %v433
        $region59: #{net_forward.3} parent=50 // pred_fallthru
          _
        %p440 = scmp.ne.s32.totalorder %s21, 0
        // Predicated region
        $region60: #{net_forward.3} parent=50 // pred_check
          %p441 = pneg %p440
        $region61: #{net_forward.3} parent=50 // pred_check_branch
          %443 = sbr.rel (%p441) target = $region63
        $region62: #{net_forward.3} parent=50 // pred_region
          %v444 = vld [vmem:[%s320] sm:$0xff]
          %v445 = vld [vmem:[%s320 + $0x8] sm:$0xff]
          %v446 = vmax.f32 %v444, %v432
          %v447 = vmax.f32 %v445, %v433
          %448 = vst [vmem:[%s320] sm:$0xff] %v446
          %449 = vst [vmem:[%s320 + $0x8] sm:$0xff] %v447
        $region63: #{net_forward.3} parent=50 // pred_fallthru
          _
        %s450 = smul.u32 2, %s20
        %p451 = scmp.lt.s32.totalorder %s19, 0
        %s452 = scalar_select %p451, %s19, 0
        %p453 = scmp.lt.s32.totalorder %s450, 3
        %s454 = scalar_select %p453, %s450, 3
        %s455 = smul.addr %s452, 4
        %s456 = sadd.s32 %s454, %s455
        %s457 = smul.addr %s456, 8
        %s458 = scalar_lea.vmem %s3, %s457
        // Predicated region
        $region64: #{net_forward.3} parent=50 // pred_check
          %p459 = pneg %p133
        $region65: #{net_forward.3} parent=50 // pred_check_branch
          %461 = sbr.rel (%p459) target = $region67
        $region66: #{net_forward.3} parent=50 // pred_region
          %s462 = smul.u32 2, %s20
        $region67: #{net_forward.3} parent=50 // pred_fallthru
          _
      $region51: #{net_forward.3} parent=5 // pred_fallthru
        _
      %p463 = scmp.le.s32.totalorder 2, %s9
      // Predicated region
      $region68: #{net_forward.3} parent=5 // pred_check
        %p464 = pneg %p463
      $region69: #{net_forward.3} parent=5 // pred_check_branch
        %466 = sbr.rel (%p464) target = $region71
      $region70: #{net_forward.3} parent=5 // pred_region
        %s467 = ssub.s32 %s9, 2
        // Predicated region
        $region72: #{net_forward.3} parent=70 // pred_check
          %p468 = pneg %p139
        $region73: #{net_forward.3} parent=70 // pred_check_branch
          %470 = sbr.rel (%p468) target = $region75
        $region74: #{net_forward.3} parent=70 // pred_region
          %s471 = smul.u32 2, %s23
          %p472 = scmp.lt.s32.totalorder %s22, 0
          %s473 = scalar_select %p472, %s22, 0
          %p474 = scmp.lt.s32.totalorder %s471, 3
          %s475 = scalar_select %p474, %s471, 3
          %s476 = smul.addr %s473, 4
          %s477 = sadd.s32 %s475, %s476
          %s478 = smul.addr %s477, 8
          %s479 = scalar_lea.vmem %s3, %s478
        $region75: #{net_forward.3} parent=70 // pred_fallthru
          _
      $region71: #{net_forward.3} parent=5 // pred_fallthru
        _
    $region6: #{net_forward.3} parent=1 // loop_footer
      %s13 = sadd.s32 1, %s9
    $region7: #{net_forward.3} parent=1 // loop_footer_branch
      %8 = sbr.rel target = $region3
    $region8: #{net_forward.3} parent=1 // loop_exit
      _

// kernel: net_forward.4
$region0: #{net_forward.4}
  #allocation0 [shape = 'u32[]', space=smem, size = 0x4, offset = 0x4, fixed_abs, tag = 'smem constant byte address 0x4 - core index']
  #allocation1 [shape = 'u32[144,128]{1,0:T(1,128)}', space=vmem, size = 0x12000, scoped, tag = 'internal scratch']
  %s0 = inlined_call_operand.vmem [shape: f32[16,256], index: 0, kind: input, shape index: {}]
  %s1 = inlined_call_operand.vmem [shape: f32[4,256,128], index: 1, kind: input, shape index: {}]
  %s2 = inlined_call_operand.vmem [shape: f32[16,1], index: 2, kind: input, shape index: {}]
  %s3 = inlined_call_operand.vmem [shape: f32[16,128], index: 3, kind: output, shape index: {}]
  %s4 = sld [smem:[#allocation0]]
  $region53: #{net_forward.4} parent=0
    _
  %s6 = ssub.s32 1, %s4
  %s7 = scalar_select 0, %s6, %s4
  loop: start=0, step=1, limit=10
  $region2: #{net_forward.4} parent=0 // loop_pre_header
    _
  $region3: #{net_forward.4} parent=0 // loop_header
    %s9 = sphi 0, %s13
    %p10 = scmp.ge.s32.totalorder %s9, 10
    %s16 = sphi 0, %s35
    %s17 = sphi 0, %s31
    %s18 = sphi 0, %s27
    %s19 = sphi 0, %s16
    %s20 = sphi 0, %s17
    %s21 = sphi 0, %s18
    %s22 = sphi 0, %s19
    %s23 = sphi 0, %s20
    %s24 = sphi 0, %s21
    %s38 = sphi 0, %s40
    %s41 = sphi 0, %s38
    %s42 = sphi 0, %s41
    %s58 = sphi 0, %s42
    %s66 = sphi 0, %s68
    %s69 = sphi 0, %s66
    %s70 = sphi 0, %s69
    %s86 = sphi 0, %s70
    %s92 = sphi 0, %s94
    %s95 = sphi 0, %s92
    %s96 = sphi 0, %s95
    %s112 = sphi 0, %s96
    %s120 = sphi 0, %s122
    %s123 = sphi 0, %s120
    %s124 = sphi 0, %s123
    %s140 = sphi 0, %s124
  $region4: #{net_forward.4} parent=0 // loop_header_branch
    %12 = sbr.rel (%p10) target = $region8
  $region5: #{net_forward.4} parent=0 // loop_body
    %s14 = ssub.s32 %s9, 1
    %s15 = ssub.s32 %s9, 2
    %s25 = sadd.s32 1, %s18
    %p26 = scmp.ge.s32.totalorder %s25, 4
    %s27 = scalar_select %p26, 0, %s25
    %s28 = sadd.s32 1, %s17
    %s29 = scalar_select %p26, %s28, %s17
    %p30 = scmp.ge.s32.totalorder %s29, 1
    %s31 = scalar_select %p30, 0, %s29
    %s32 = sadd.s32 1, %s16
    %s33 = scalar_select %p30, %s32, %s16
    %p34 = scmp.ge.s32.totalorder %s33, 2
    %s35 = scalar_select %p34, 0, %s33
    %s36 = ssub.s32 %s16, %s35
    %p37 = scmp.eq.s32.totalorder %s36, 0
    %s39 = sadd.s32 %s38, 1
    %s40 = scalar_select %p37, %s38, %s39
    %p43 = pneg %p37
    %p44 = scmp.eq.s32.totalorder %s9, 7
    %p45 = por %p43, %p44
    %p46 = scmp.ne.s32.totalorder %s38, %s41
    %p47 = scmp.eq.s32.totalorder %s9, 0
    %p48 = por %p46, %p47
    %p49 = scmp.ne.s32.totalorder %s38, %s41
    %p50 = scmp.eq.s32.totalorder %s14, 7
    %p51 = por %p49, %p50
    %p52 = scmp.ne.s32.totalorder %s41, %s42
    %p53 = scmp.eq.s32.totalorder %s14, 0
    %p54 = por %p52, %p53
    %p55 = scmp.ne.s32.totalorder %s41, %s42
    %p56 = scmp.eq.s32.totalorder %s15, 7
    %p57 = por %p55, %p56
    %p59 = scmp.ne.s32.totalorder %s42, %s58
    %p60 = scmp.eq.s32.totalorder %s15, 0
    %p61 = por %p59, %p60
    %s62 = ssub.s32 %s18, %s27
    %s63 = ssub.s32 %s17, %s31
    %s64 = sor.u32 %s62, %s63
    %p65 = scmp.eq.s32.totalorder %s64, 0
    %s67 = sadd.s32 %s66, 1
    %s68 = scalar_select %p65, %s66, %s67
    %p71 = pneg %p65
    %p72 = scmp.eq.s32.totalorder %s9, 7
    %p73 = por %p71, %p72
    %p74 = scmp.ne.s32.totalorder %s66, %s69
    %p75 = scmp.eq.s32.totalorder %s9, 0
    %p76 = por %p74, %p75
    %p77 = scmp.ne.s32.totalorder %s66, %s69
    %p78 = scmp.eq.s32.totalorder %s14, 7
    %p79 = por %p77, %p78
    %p80 = scmp.ne.s32.totalorder %s69, %s70
    %p81 = scmp.eq.s32.totalorder %s14, 0
    %p82 = por %p80, %p81
    %p83 = scmp.ne.s32.totalorder %s69, %s70
    %p84 = scmp.eq.s32.totalorder %s15, 7
    %p85 = por %p83, %p84
    %p87 = scmp.ne.s32.totalorder %s70, %s86
    %p88 = scmp.eq.s32.totalorder %s15, 0
    %p89 = por %p87, %p88
    %s90 = ssub.s32 %s16, %s35
    %p91 = scmp.eq.s32.totalorder %s90, 0
    %s93 = sadd.s32 %s92, 1
    %s94 = scalar_select %p91, %s92, %s93
    %p97 = pneg %p91
    %p98 = scmp.eq.s32.totalorder %s9, 7
    %p99 = por %p97, %p98
    %p100 = scmp.ne.s32.totalorder %s92, %s95
    %p101 = scmp.eq.s32.totalorder %s9, 0
    %p102 = por %p100, %p101
    %p103 = scmp.ne.s32.totalorder %s92, %s95
    %p104 = scmp.eq.s32.totalorder %s14, 7
    %p105 = por %p103, %p104
    %p106 = scmp.ne.s32.totalorder %s95, %s96
    %p107 = scmp.eq.s32.totalorder %s14, 0
    %p108 = por %p106, %p107
    %p109 = scmp.ne.s32.totalorder %s95, %s96
    %p110 = scmp.eq.s32.totalorder %s15, 7
    %p111 = por %p109, %p110
    %p113 = scmp.ne.s32.totalorder %s96, %s112
    %p114 = scmp.eq.s32.totalorder %s15, 0
    %p115 = por %p113, %p114
    %s116 = ssub.s32 %s16, %s35
    %s117 = ssub.s32 %s17, %s31
    %s118 = sor.u32 %s116, %s117
    %p119 = scmp.eq.s32.totalorder %s118, 0
    %s121 = sadd.s32 %s120, 1
    %s122 = scalar_select %p119, %s120, %s121
    %p125 = pneg %p119
    %p126 = scmp.eq.s32.totalorder %s9, 7
    %p127 = por %p125, %p126
    %p128 = scmp.ne.s32.totalorder %s120, %s123
    %p129 = scmp.eq.s32.totalorder %s9, 0
    %p130 = por %p128, %p129
    %p131 = scmp.ne.s32.totalorder %s120, %s123
    %p132 = scmp.eq.s32.totalorder %s14, 7
    %p133 = por %p131, %p132
    %p134 = scmp.ne.s32.totalorder %s123, %s124
    %p135 = scmp.eq.s32.totalorder %s14, 0
    %p136 = por %p134, %p135
    %p137 = scmp.ne.s32.totalorder %s123, %s124
    %p138 = scmp.eq.s32.totalorder %s15, 7
    %p139 = por %p137, %p138
    %p141 = scmp.ne.s32.totalorder %s124, %s140
    %p142 = scmp.eq.s32.totalorder %s15, 0
    %p143 = por %p141, %p142
    %p144 = scmp.le.s32.totalorder 1, %s9
    %p145 = scmp.lt.s32.totalorder %s9, 9
    %p146 = pnand %p144, %p145
    %p147 = pneg %p146
    // Predicated region
    $region9: #{net_forward.4} parent=5 // pred_check
      _
    $region10: #{net_forward.4} parent=5 // pred_check_branch
      %149 = sbr.rel (%p146) target = $region12
    $region11: #{net_forward.4} parent=5 // pred_region
      %s150 = ssub.s32 %s9, 1
    $region12: #{net_forward.4} parent=5 // pred_fallthru
      _
    %p151 = scmp.lt.s32.totalorder %s9, 8
    // Predicated region
    $region13: #{net_forward.4} parent=5 // pred_check
      %p152 = pneg %p151
    $region14: #{net_forward.4} parent=5 // pred_check_branch
      %154 = sbr.rel (%p152) target = $region16
    $region15: #{net_forward.4} parent=5 // pred_region
      // Predicated region
      $region17: #{net_forward.4} parent=15 // pred_check
        %p155 = pneg %p48
      $region18: #{net_forward.4} parent=15 // pred_check_branch
        %157 = sbr.rel (%p155) target = $region20
      $region19: #{net_forward.4} parent=15 // pred_region
        %p158 = scmp.lt.s32.totalorder %s16, 1
        %s159 = scalar_select %p158, %s16, 1
        %s160 = smul.addr %s159, 2
        %s161 = smul.addr %s160, 8
        %s162 = scalar_lea.vmem %s0, %s161
      $region20: #{net_forward.4} parent=15 // pred_fallthru
        _
      // Predicated region
      $region21: #{net_forward.4} parent=15 // pred_check
        %p163 = pneg %p76
      $region22: #{net_forward.4} parent=15 // pred_check_branch
        %165 = sbr.rel (%p163) target = $region24
      $region23: #{net_forward.4} parent=15 // pred_region
        %p166 = scmp.lt.s32.totalorder %s18, 3
        %s167 = scalar_select %p166, %s18, 3
        %p168 = scmp.lt.s32.totalorder %s17, 0
        %s169 = scalar_select %p168, %s17, 0
        %s170 = smul.addr %s167, 32
        %s171 = sadd.s32 %s169, %s170
        %s172 = smul.addr %s171, 8
        %s173 = scalar_lea.vmem %s1, %s172
      $region24: #{net_forward.4} parent=15 // pred_fallthru
        _
      // Predicated region
      $region25: #{net_forward.4} parent=15 // pred_check
        %p174 = pneg %p102
      $region26: #{net_forward.4} parent=15 // pred_check_branch
        %176 = sbr.rel (%p174) target = $region28
      $region27: #{net_forward.4} parent=15 // pred_region
        %p177 = scmp.lt.s32.totalorder %s16, 1
        %s178 = scalar_select %p177, %s16, 1
        %s179 = smul.addr %s178, 8
        %s180 = scalar_lea.vmem %s2, %s179
      $region28: #{net_forward.4} parent=15 // pred_fallthru
        _
    $region16: #{net_forward.4} parent=5 // pred_fallthru
      _
    %p181 = scmp.le.s32.totalorder 1, %s9
    %p182 = scmp.lt.s32.totalorder %s9, 9
    %p183 = pnand %p181, %p182
    %p184 = pneg %p183
    // Predicated region
    $region29: #{net_forward.4} parent=5 // pred_check
      _
    $region30: #{net_forward.4} parent=5 // pred_check_branch
      %186 = sbr.rel (%p183) target = $region32
    $region31: #{net_forward.4} parent=5 // pred_region
      %s187 = ssub.s32 %s9, 1
      %p188 = scmp.lt.s32.totalorder %s19, 1
      %s189 = scalar_select %p188, %s19, 1
      %s190 = smul.addr %s189, 2
      %s191 = smul.addr %s190, 8
      %s192 = scalar_lea.vmem %s0, %s191
      %p193 = pneg %p54
      %p194 = pneg %p51
      %p195 = scmp.lt.s32.totalorder %s21, 3
      %s196 = scalar_select %p195, %s21, 3
      %p197 = scmp.lt.s32.totalorder %s20, 0
      %s198 = scalar_select %p197, %s20, 0
      %s199 = smul.addr %s196, 32
      %s200 = sadd.s32 %s198, %s199
      %s201 = smul.addr %s200, 8
      %s202 = scalar_lea.vmem %s1, %s201
      %p203 = pneg %p82
      %p204 = pneg %p79
      %p205 = scmp.lt.s32.totalorder %s19, 1
      %s206 = scalar_select %p205, %s19, 1
      %s207 = smul.addr %s206, 8
      %s208 = scalar_lea.vmem %s2, %s207
      %p209 = pneg %p108
      %p210 = pneg %p105
      %p211 = pneg %p136
      %p212 = pneg %p133
      %p213 = scmp.lt.s32.totalorder %s19, 1
      %s214 = scalar_select %p213, %s19, 1
      %p215 = scmp.lt.s32.totalorder %s20, 0
      %s216 = scalar_select %p215, %s20, 0
      %s217 = sadd.s32 %s216, %s214
      %s218 = smul.addr %s217, 8
      %s219 = scalar_lea.vmem %s3, %s218
      %p220 = scmp.lt.s32.totalorder %s19, 1
      %s221 = scalar_select %p220, %s19, 1
      %s222 = smul.addr %s221, 2
      %s223 = smul.addr %s222, 8
      %s224 = scalar_lea.vmem %s0, %s223
      %p225 = scmp.lt.s32.totalorder %s21, 3
      %s226 = scalar_select %p225, %s21, 3
      %p227 = scmp.lt.s32.totalorder %s20, 0
      %s228 = scalar_select %p227, %s20, 0
      %s229 = smul.addr %s226, 32
      %s230 = sadd.s32 %s228, %s229
      %s231 = smul.addr %s230, 8
      %s232 = scalar_lea.vmem %s1, %s231
      %p233 = scmp.lt.s32.totalorder %s19, 1
      %s234 = scalar_select %p233, %s19, 1
      %s235 = smul.addr %s234, 8
      %s236 = scalar_lea.vmem %s2, %s235
      %p237 = scmp.lt.s32.totalorder %s19, 1
      %s238 = scalar_select %p237, %s19, 1
      %p239 = scmp.lt.s32.totalorder %s20, 0
      %s240 = scalar_select %p239, %s20, 0
      %s241 = sadd.s32 %s240, %s238
      %s242 = smul.addr %s241, 8
      %s243 = scalar_lea.vmem %s3, %s242
      %v244 = vld [vmem:[%s224] sm:$0xff]
      %v245 = vld [vmem:[%s224 + $0x8] sm:$0xff]
      %v246 = vld [vmem:[%s232] sm:$0xff]
      %v247 = vld [vmem:[%s232 + $0x8] sm:$0xff]
      %v248 = vld [vmem:[%s232 + $0x10] sm:$0xff]
      %v249 = vld [vmem:[%s232 + $0x18] sm:$0xff]
      %v250 = vld [vmem:[%s232 + $0x20] sm:$0xff]
      %v251 = vld [vmem:[%s232 + $0x28] sm:$0xff]
      %v252 = vld [vmem:[%s232 + $0x30] sm:$0xff]
      %v253 = vld [vmem:[%s232 + $0x38] sm:$0xff]
      %v254 = vld [vmem:[%s232 + $0x40] sm:$0xff]
      %v255 = vld [vmem:[%s232 + $0x48] sm:$0xff]
      %v256 = vld [vmem:[%s232 + $0x50] sm:$0xff]
      %v257 = vld [vmem:[%s232 + $0x58] sm:$0xff]
      %v258 = vld [vmem:[%s232 + $0x60] sm:$0xff]
      %v259 = vld [vmem:[%s232 + $0x68] sm:$0xff]
      %v260 = vld [vmem:[%s232 + $0x70] sm:$0xff]
      %v261 = vld [vmem:[%s232 + $0x78] sm:$0xff]
      %v262 = vld [vmem:[%s232 + $0x80] sm:$0xff]
      %v263 = vld [vmem:[%s232 + $0x88] sm:$0xff]
      %v264 = vld [vmem:[%s232 + $0x90] sm:$0xff]
      %v265 = vld [vmem:[%s232 + $0x98] sm:$0xff]
      %v266 = vld [vmem:[%s232 + $0xa0] sm:$0xff]
      %v267 = vld [vmem:[%s232 + $0xa8] sm:$0xff]
      %v268 = vld [vmem:[%s232 + $0xb0] sm:$0xff]
      %v269 = vld [vmem:[%s232 + $0xb8] sm:$0xff]
      %v270 = vld [vmem:[%s232 + $0xc0] sm:$0xff]
      %v271 = vld [vmem:[%s232 + $0xc8] sm:$0xff]
      %v272 = vld [vmem:[%s232 + $0xd0] sm:$0xff]
      %v273 = vld [vmem:[%s232 + $0xd8] sm:$0xff]
      %v274 = vld [vmem:[%s232 + $0xe0] sm:$0xff]
      %v275 = vld [vmem:[%s232 + $0xe8] sm:$0xff]
      %v276 = vld [vmem:[%s232 + $0xf0] sm:$0xff]
      %v277 = vld [vmem:[%s232 + $0xf8] sm:$0xff]
      %v278 = vld [vmem:[%s236] sm:$0xff]
      %280 = vset.pattern.permute.xlu0 0
      %281 = vperm.xlu0 %280, %v278
      %v282 = vpop.permute.xlu0 %281
      %284 = vmatprep.subr.mxu0 0.0
      %285 = vmatpush1.msra.mxu0 %v246
      %286 = vmatprep.subr.mxu0 0.0
      %287 = vmatpush1.msra.mxu0 %v247
      %288 = vmatprep.subr.mxu0 0.0
      %289 = vmatpush1.msra.mxu0 %v248
      %290 = vmatprep.subr.mxu0 0.0
      %291 = vmatpush1.msra.mxu0 %v249
      %292 = vmatprep.subr.mxu0 0.0
      %293 = vmatpush1.msra.mxu0 %v250
      %294 = vmatprep.subr.mxu0 0.0
      %295 = vmatpush1.msra.mxu0 %v251
      %296 = vmatprep.subr.mxu0 0.0
      %297 = vmatpush1.msra.mxu0 %v252
      %298 = vmatprep.subr.mxu0 0.0
      %299 = vmatpush1.msra.mxu0 %v253
      %300 = vmatprep.subr.mxu0 0.0
      %301 = vmatpush1.msra.mxu0 %v254
      %302 = vmatprep.subr.mxu0 0.0
      %303 = vmatpush1.msra.mxu0 %v255
      %304 = vmatprep.subr.mxu0 0.0
      %305 = vmatpush1.msra.mxu0 %v256
      %306 = vmatprep.subr.mxu0 0.0
      %307 = vmatpush1.msra.mxu0 %v257
      %308 = vmatprep.subr.mxu0 0.0
      %309 = vmatpush1.msra.mxu0 %v258
      %310 = vmatprep.subr.mxu0 0.0
      %311 = vmatpush1.msra.mxu0 %v259
      %312 = vmatprep.subr.mxu0 0.0
      %313 = vmatpush1.msra.mxu0 %v260
      %314 = vmatprep.subr.mxu0 0.0
      %315 = vmatpush1.msra.mxu0 %v261
      %316 = vmatprep.subr.mxu0 0.0
      %317 = vmatpush1.msra.mxu0 %v262
      %318 = vmatprep.subr.mxu0 0.0
      %319 = vmatpush1.msra.mxu0 %v263
      %320 = vmatprep.subr.mxu0 0.0
      %321 = vmatpush1.msra.mxu0 %v264
      %322 = vmatprep.subr.mxu0 0.0
      %323 = vmatpush1.msra.mxu0 %v265
      %324 = vmatprep.subr.mxu0 0.0
      %325 = vmatpush1.msra.mxu0 %v266
      %326 = vmatprep.subr.mxu0 0.0
      %327 = vmatpush1.msra.mxu0 %v267
      %328 = vmatprep.subr.mxu0 0.0
      %329 = vmatpush1.msra.mxu0 %v268
      %330 = vmatprep.subr.mxu0 0.0
      %331 = vmatpush1.msra.mxu0 %v269
      %332 = vmatprep.subr.mxu0 0.0
      %333 = vmatpush1.msra.mxu0 %v270
      %334 = vmatprep.subr.mxu0 0.0
      %335 = vmatpush1.msra.mxu0 %v271
      %336 = vmatprep.subr.mxu0 0.0
      %337 = vmatpush1.msra.mxu0 %v272
      %338 = vmatprep.subr.mxu0 0.0
      %339 = vmatpush1.msra.mxu0 %v273
      %340 = vmatprep.subr.mxu0 0.0
      %341 = vmatpush1.msra.mxu0 %v274
      %342 = vmatprep.subr.mxu0 0.0
      %343 = vmatpush1.msra.mxu0 %v275
      %344 = vmatprep.subr.mxu0 0.0
      %345 = vmatpush1.msra.mxu0 %v276
      %346 = vmatprep.subr.mxu0 0.0
      %347 = vmatpush1.msra.mxu0 %v277
      %348 = vmatprep.mubr.f32.mxu0 %v245
      %349 = vmatmul.mubr.f32.gmra.mrb[0].mxu0 %v244
      %v350 = vpop.f32.mrb[0].mxu0
      %v351 = vadd.f32 %v282, %v350
      %v352 = vpop.f32.mrb[0].mxu0
      %353 = vdwg.mxu0
      %v354 = vmax.f32 %v351, 0.0
      %p355 = scmp.eq.s32.totalorder %s21, 0
      // Predicated region
      $region33: #{net_forward.4} parent=31 // pred_check
        %p356 = pneg %p355
      $region34: #{net_forward.4} parent=31 // pred_check_branch
        %358 = sbr.rel (%p356) target = $region36
      $region35: #{net_forward.4} parent=31 // pred_region
        %359 = vst [vmem:[%s243] sm:$0xff] %v354
      $region36: #{net_forward.4} parent=31 // pred_fallthru
        _
      %p360 = scmp.ne.s32.totalorder %s21, 0
      // Predicated region
      $region37: #{net_forward.4} parent=31 // pred_check
        %p361 = pneg %p360
      $region38: #{net_forward.4} parent=31 // pred_check_branch
        %363 = sbr.rel (%p361) target = $region40
      $region39: #{net_forward.4} parent=31 // pred_region
        %v364 = vld [vmem:[%s243] sm:$0xff]
        %v365 = vmax.f32 %v364, %v354
        %366 = vst [vmem:[%s243] sm:$0xff] %v365
      $region40: #{net_forward.4} parent=31 // pred_fallthru
        _
      %p367 = scmp.lt.s32.totalorder %s19, 1
      %s368 = scalar_select %p367, %s19, 1
      %p369 = scmp.lt.s32.totalorder %s20, 0
      %s370 = scalar_select %p369, %s20, 0
      %s371 = sadd.s32 %s370, %s368
      %s372 = smul.addr %s371, 8
      %s373 = scalar_lea.vmem %s3, %s372
      // Predicated region
      $region41: #{net_forward.4} parent=31 // pred_check
        %p374 = pneg %p133
      $region42: #{net_forward.4} parent=31 // pred_check_branch
        %376 = sbr.rel (%p374) target = $region44
      $region43: #{net_forward.4} parent=31 // pred_region
        _
      $region44: #{net_forward.4} parent=31 // pred_fallthru
        _
    $region32: #{net_forward.4} parent=5 // pred_fallthru
      _
    %p377 = scmp.le.s32.totalorder 2, %s9
    // Predicated region
    $region45: #{net_forward.4} parent=5 // pred_check
      %p378 = pneg %p377
    $region46: #{net_forward.4} parent=5 // pred_check_branch
      %380 = sbr.rel (%p378) target = $region48
    $region47: #{net_forward.4} parent=5 // pred_region
      %s381 = ssub.s32 %s9, 2
      // Predicated region
      $region49: #{net_forward.4} parent=47 // pred_check
        %p382 = pneg %p139
      $region50: #{net_forward.4} parent=47 // pred_check_branch
        %384 = sbr.rel (%p382) target = $region52
      $region51: #{net_forward.4} parent=47 // pred_region
        %p385 = scmp.lt.s32.totalorder %s22, 1
        %s386 = scalar_select %p385, %s22, 1
        %p387 = scmp.lt.s32.totalorder %s23, 0
        %s388 = scalar_select %p387, %s23, 0
        %s389 = sadd.s32 %s388, %s386
        %s390 = smul.addr %s389, 8
        %s391 = scalar_lea.vmem %s3, %s390
      $region52: #{net_forward.4} parent=47 // pred_fallthru
        _
    $region48: #{net_forward.4} parent=5 // pred_fallthru
      _
  $region6: #{net_forward.4} parent=0 // loop_footer
    %s13 = sadd.s32 1, %s9
  $region7: #{net_forward.4} parent=0 // loop_footer_branch
    %8 = sbr.rel target = $region3
  $region8: #{net_forward.4} parent=0 // loop_exit
    _

// kernel: net_forward.5
$region0: #{net_forward.5}
  #allocation0 [shape = 'u32[]', space=smem, size = 0x4, offset = 0x4, fixed_abs, tag = 'smem constant byte address 0x4 - core index']
  #allocation1 [shape = 'u32[144,128]{1,0:T(1,128)}', space=vmem, size = 0x12000, scoped, tag = 'internal scratch']
  %s0 = inlined_call_operand.vmem [shape: f32[8,400], index: 0, kind: input, shape index: {}]
  %s1 = inlined_call_operand.vmem [shape: f32[400,128], index: 1, kind: input, shape index: {}]
  %s2 = inlined_call_operand.vmem [shape: f32[1,128], index: 2, kind: input, shape index: {}]
  %s3 = inlined_call_operand.vmem [shape: f32[128,128], index: 3, kind: input, shape index: {}]
  %s4 = inlined_call_operand.vmem [shape: f32[1,128], index: 4, kind: input, shape index: {}]
  %s5 = inlined_call_operand.vmem [shape: f32[128,128], index: 5, kind: input, shape index: {}]
  %s6 = inlined_call_operand.vmem [shape: f32[1,128], index: 6, kind: input, shape index: {}]
  %s7 = inlined_call_operand.vmem [shape: f32[8,128], index: 7, kind: output, shape index: {}]
  %s8 = sld [smem:[#allocation0]]
  $region38: #{net_forward.5} parent=0
    _
  %s10 = ssub.s32 1, %s8
  %s11 = scalar_select 0, %s10, %s8
  // Predicated region
  $region2: #{net_forward.5} parent=0 // pred_check
    _
  $region3: #{net_forward.5} parent=0 // pred_check_branch
    %13 = sbr.rel (0) target = $region5
  $region4: #{net_forward.5} parent=0 // pred_region
    _
  $region5: #{net_forward.5} parent=0 // pred_fallthru
    _
  // Predicated region
  $region6: #{net_forward.5} parent=0 // pred_check
    _
  $region7: #{net_forward.5} parent=0 // pred_check_branch
    %15 = sbr.rel (0) target = $region9
  $region8: #{net_forward.5} parent=0 // pred_region
    _
  $region9: #{net_forward.5} parent=0 // pred_fallthru
    _
  // Predicated region
  $region10: #{net_forward.5} parent=0 // pred_check
    _
  $region11: #{net_forward.5} parent=0 // pred_check_branch
    %17 = sbr.rel (0) target = $region13
  $region12: #{net_forward.5} parent=0 // pred_region
    _
  $region13: #{net_forward.5} parent=0 // pred_fallthru
    _
  // Predicated region
  $region14: #{net_forward.5} parent=0 // pred_check
    _
  $region15: #{net_forward.5} parent=0 // pred_check_branch
    %19 = sbr.rel (0) target = $region17
  $region16: #{net_forward.5} parent=0 // pred_region
    _
  $region17: #{net_forward.5} parent=0 // pred_fallthru
    _
  // Predicated region
  $region18: #{net_forward.5} parent=0 // pred_check
    _
  $region19: #{net_forward.5} parent=0 // pred_check_branch
    %21 = sbr.rel (0) target = $region21
  $region20: #{net_forward.5} parent=0 // pred_region
    _
  $region21: #{net_forward.5} parent=0 // pred_fallthru
    _
  // Predicated region
  $region22: #{net_forward.5} parent=0 // pred_check
    _
  $region23: #{net_forward.5} parent=0 // pred_check_branch
    %23 = sbr.rel (0) target = $region25
  $region24: #{net_forward.5} parent=0 // pred_region
    _
  $region25: #{net_forward.5} parent=0 // pred_fallthru
    _
  // Predicated region
  $region26: #{net_forward.5} parent=0 // pred_check
    _
  $region27: #{net_forward.5} parent=0 // pred_check_branch
    %25 = sbr.rel (0) target = $region29
  $region28: #{net_forward.5} parent=0 // pred_region
    _
  $region29: #{net_forward.5} parent=0 // pred_fallthru
    _
  %v26 = vld [vmem:[%s0] sm:$0xff]
  %v27 = vld [vmem:[%s0 + $0x8] sm:$0xff]
  %v28 = vld [vmem:[%s0 + $0x10] sm:$0xff]
  %v29 = vld [vmem:[%s0 + $0x18] sm:$0xff]
  %v30 = vld [vmem:[%s1] sm:$0xff]
  %v31 = vld [vmem:[%s1 + $0x8] sm:$0xff]
  %v32 = vld [vmem:[%s1 + $0x10] sm:$0xff]
  %v33 = vld [vmem:[%s1 + $0x18] sm:$0xff]
  %v34 = vld [vmem:[%s1 + $0x20] sm:$0xff]
  %v35 = vld [vmem:[%s1 + $0x28] sm:$0xff]
  %v36 = vld [vmem:[%s1 + $0x30] sm:$0xff]
  %v37 = vld [vmem:[%s1 + $0x38] sm:$0xff]
  %v38 = vld [vmem:[%s1 + $0x40] sm:$0xff]
  %v39 = vld [vmem:[%s1 + $0x48] sm:$0xff]
  %v40 = vld [vmem:[%s1 + $0x50] sm:$0xff]
  %v41 = vld [vmem:[%s1 + $0x58] sm:$0xff]
  %v42 = vld [vmem:[%s1 + $0x60] sm:$0xff]
  %v43 = vld [vmem:[%s1 + $0x68] sm:$0xff]
  %v44 = vld [vmem:[%s1 + $0x70] sm:$0xff]
  %v45 = vld [vmem:[%s1 + $0x78] sm:$0xff]
  %v46 = vld [vmem:[%s1 + $0x80] sm:$0xff]
  %v47 = vld [vmem:[%s1 + $0x88] sm:$0xff]
  %v48 = vld [vmem:[%s1 + $0x90] sm:$0xff]
  %v49 = vld [vmem:[%s1 + $0x98] sm:$0xff]
  %v50 = vld [vmem:[%s1 + $0xa0] sm:$0xff]
  %v51 = vld [vmem:[%s1 + $0xa8] sm:$0xff]
  %v52 = vld [vmem:[%s1 + $0xb0] sm:$0xff]
  %v53 = vld [vmem:[%s1 + $0xb8] sm:$0xff]
  %v54 = vld [vmem:[%s1 + $0xc0] sm:$0xff]
  %v55 = vld [vmem:[%s1 + $0xc8] sm:$0xff]
  %v56 = vld [vmem:[%s1 + $0xd0] sm:$0xff]
  %v57 = vld [vmem:[%s1 + $0xd8] sm:$0xff]
  %v58 = vld [vmem:[%s1 + $0xe0] sm:$0xff]
  %v59 = vld [vmem:[%s1 + $0xe8] sm:$0xff]
  %v60 = vld [vmem:[%s1 + $0xf0] sm:$0xff]
  %v61 = vld [vmem:[%s1 + $0xf8] sm:$0xff]
  %v62 = vld [vmem:[%s1 + $0x100] sm:$0xff]
  %v63 = vld [vmem:[%s1 + $0x108] sm:$0xff]
  %v64 = vld [vmem:[%s1 + $0x110] sm:$0xff]
  %v65 = vld [vmem:[%s1 + $0x118] sm:$0xff]
  %v66 = vld [vmem:[%s1 + $0x120] sm:$0xff]
  %v67 = vld [vmem:[%s1 + $0x128] sm:$0xff]
  %v68 = vld [vmem:[%s1 + $0x130] sm:$0xff]
  %v69 = vld [vmem:[%s1 + $0x138] sm:$0xff]
  %v70 = vld [vmem:[%s1 + $0x140] sm:$0xff]
  %v71 = vld [vmem:[%s1 + $0x148] sm:$0xff]
  %v72 = vld [vmem:[%s1 + $0x150] sm:$0xff]
  %v73 = vld [vmem:[%s1 + $0x158] sm:$0xff]
  %v74 = vld [vmem:[%s1 + $0x160] sm:$0xff]
  %v75 = vld [vmem:[%s1 + $0x168] sm:$0xff]
  %v76 = vld [vmem:[%s1 + $0x170] sm:$0xff]
  %v77 = vld [vmem:[%s1 + $0x178] sm:$0xff]
  %v78 = vld [vmem:[%s1 + $0x180] sm:$0xff]
  %v79 = vld [vmem:[%s1 + $0x188] sm:$0xff]
  %v80 = vld [vmem:[%s2] sm:$0x1]
  %v82 = vlaneseq
  %v83 = vshrl.u32 %v82, 7
  %v84 = vsub.s32 0, %v83
  %v85 = vrot.slane %v80, %v84
  %vm87 = vcmask 130048
  %v89 = vsel %vm87, %v29, 0
  %91 = vmatprep.subr.mxu0 0.0
  %92 = vmatpush1.msra.mxu0 %v30
  %93 = vmatprep.subr.mxu0 0.0
  %94 = vmatpush1.msra.mxu0 %v31
  %95 = vmatprep.subr.mxu0 0.0
  %96 = vmatpush1.msra.mxu0 %v32
  %97 = vmatprep.subr.mxu0 0.0
  %98 = vmatpush1.msra.mxu0 %v33
  %99 = vmatprep.subr.mxu0 0.0
  %100 = vmatpush1.msra.mxu0 %v34
  %101 = vmatprep.subr.mxu0 0.0
  %102 = vmatpush1.msra.mxu0 %v35
  %103 = vmatprep.subr.mxu0 0.0
  %104 = vmatpush1.msra.mxu0 %v36
  %105 = vmatprep.subr.mxu0 0.0
  %106 = vmatpush1.msra.mxu0 %v37
  %107 = vmatprep.subr.mxu0 0.0
  %108 = vmatpush1.msra.mxu0 %v38
  %109 = vmatprep.subr.mxu0 0.0
  %110 = vmatpush1.msra.mxu0 %v39
  %111 = vmatprep.subr.mxu0 0.0
  %112 = vmatpush1.msra.mxu0 %v40
  %113 = vmatprep.subr.mxu0 0.0
  %114 = vmatpush1.msra.mxu0 %v41
  %115 = vmatprep.subr.mxu0 0.0
  %116 = vmatpush1.msra.mxu0 %v42
  %117 = vmatprep.subr.mxu0 0.0
  %118 = vmatpush1.msra.mxu0 %v43
  %119 = vmatprep.subr.mxu0 0.0
  %120 = vmatpush1.msra.mxu0 %v44
  %121 = vmatprep.subr.mxu0 0.0
  %122 = vmatpush1.msra.mxu0 %v45
  %123 = vmatprep.subr.mxu0 0.0
  %124 = vmatpush1.msra.mxu0 %v46
  %125 = vmatprep.subr.mxu0 0.0
  %126 = vmatpush1.msra.mxu0 %v47
  %127 = vmatprep.subr.mxu0 0.0
  %128 = vmatpush1.msra.mxu0 %v48
  %129 = vmatprep.subr.mxu0 0.0
  %130 = vmatpush1.msra.mxu0 %v49
  %131 = vmatprep.subr.mxu0 0.0
  %132 = vmatpush1.msra.mxu0 %v50
  %133 = vmatprep.subr.mxu0 0.0
  %134 = vmatpush1.msra.mxu0 %v51
  %135 = vmatprep.subr.mxu0 0.0
  %136 = vmatpush1.msra.mxu0 %v52
  %137 = vmatprep.subr.mxu0 0.0
  %138 = vmatpush1.msra.mxu0 %v53
  %139 = vmatprep.subr.mxu0 0.0
  %140 = vmatpush1.msra.mxu0 %v54
  %141 = vmatprep.subr.mxu0 0.0
  %142 = vmatpush1.msra.mxu0 %v55
  %143 = vmatprep.subr.mxu0 0.0
  %144 = vmatpush1.msra.mxu0 %v56
  %145 = vmatprep.subr.mxu0 0.0
  %146 = vmatpush1.msra.mxu0 %v57
  %147 = vmatprep.subr.mxu0 0.0
  %148 = vmatpush1.msra.mxu0 %v58
  %149 = vmatprep.subr.mxu0 0.0
  %150 = vmatpush1.msra.mxu0 %v59
  %151 = vmatprep.subr.mxu0 0.0
  %152 = vmatpush1.msra.mxu0 %v60
  %153 = vmatprep.subr.mxu0 0.0
  %154 = vmatpush1.msra.mxu0 %v61
  %155 = vmatprep.mubr.f32.mxu0 %v27
  %156 = vmatmul.mubr.f32.gmra.mrb[0].mxu0 %v26
  %v157 = vpop.f32.mrb[0].mxu0
  %v158 = vadd.f32 %v85, %v157
  %v159 = vpop.f32.mrb[0].mxu0
  %160 = vdwg.mxu0
  %161 = vmatprep.subr.mxu0 0.0
  %162 = vmatpush1.msra.mxu0 %v62
  %163 = vmatprep.subr.mxu0 0.0
  %164 = vmatpush1.msra.mxu0 %v63
  %165 = vmatprep.subr.mxu0 0.0
  %166 = vmatpush1.msra.mxu0 %v64
  %167 = vmatprep.subr.mxu0 0.0
  %168 = vmatpush1.msra.mxu0 %v65
  %169 = vmatprep.subr.mxu0 0.0
  %170 = vmatpush1.msra.mxu0 %v66
  %171 = vmatprep.subr.mxu0 0.0
  %172 = vmatpush1.msra.mxu0 %v67
  %173 = vmatprep.subr.mxu0 0.0
  %174 = vmatpush1.msra.mxu0 %v68
  %175 = vmatprep.subr.mxu0 0.0
  %176 = vmatpush1.msra.mxu0 %v69
  %177 = vmatprep.subr.mxu0 0.0
  %178 = vmatpush1.msra.mxu0 %v70
  %179 = vmatprep.subr.mxu0 0.0
  %180 = vmatpush1.msra.mxu0 %v71
  %181 = vmatprep.subr.mxu0 0.0
  %182 = vmatpush1.msra.mxu0 %v72
  %183 = vmatprep.subr.mxu0 0.0
  %184 = vmatpush1.msra.mxu0 %v73
  %185 = vmatprep.subr.mxu0 0.0
  %186 = vmatpush1.msra.mxu0 %v74
  %187 = vmatprep.subr.mxu0 0.0
  %188 = vmatpush1.msra.mxu0 %v75
  %189 = vmatprep.subr.mxu0 0.0
  %190 = vmatpush1.msra.mxu0 %v76
  %191 = vmatprep.subr.mxu0 0.0
  %192 = vmatpush1.msra.mxu0 %v77
  %193 = vmatprep.subr.mxu0 0.0
  %194 = vmatpush1.msra.mxu0 %v78
  %195 = vmatprep.subr.mxu0 0.0
  %196 = vmatpush1.msra.mxu0 %v79
  %197 = vmatprep.subr.mxu0 0.0
  %198 = vmatpush1.msra.mxu0 0.0
  %199 = vmatprep.subr.mxu0 0.0
  %200 = vmatpush1.msra.mxu0 0.0
  %201 = vmatprep.subr.mxu0 0.0
  %202 = vmatpush1.msra.mxu0 0.0
  %203 = vmatprep.subr.mxu0 0.0
  %204 = vmatpush1.msra.mxu0 0.0
  %205 = vmatprep.subr.mxu0 0.0
  %206 = vmatpush1.msra.mxu0 0.0
  %207 = vmatprep.subr.mxu0 0.0
  %208 = vmatpush1.msra.mxu0 0.0
  %209 = vmatprep.subr.mxu0 0.0
  %210 = vmatpush1.msra.mxu0 0.0
  %211 = vmatprep.subr.mxu0 0.0
  %212 = vmatpush1.msra.mxu0 0.0
  %213 = vmatprep.subr.mxu0 0.0
  %214 = vmatpush1.msra.mxu0 0.0
  %215 = vmatprep.subr.mxu0 0.0
  %216 = vmatpush1.msra.mxu0 0.0
  %217 = vmatprep.subr.mxu0 0.0
  %218 = vmatpush1.msra.mxu0 0.0
  %219 = vmatprep.subr.mxu0 0.0
  %220 = vmatpush1.msra.mxu0 0.0
  %221 = vmatprep.subr.mxu0 0.0
  %222 = vmatpush1.msra.mxu0 0.0
  %223 = vmatprep.subr.mxu0 0.0
  %224 = vmatpush1.msra.mxu0 0.0
  %225 = vmatprep.mubr.f32.mxu0 %v89
  %226 = vmatmul.mubr.f32.gmra.mrb[0].mxu0 %v28
  %v227 = vpop.f32.mrb[0].mxu0
  %v228 = vadd.f32 %v158, %v227
  %v229 = vpop.f32.mrb[0].mxu0
  %230 = vdwg.mxu0
  %v231 = vmax.f32 %v228, 0.0
  %v232 = vld [vmem:[%s3] sm:$0xff]
  %v233 = vld [vmem:[%s3 + $0x8] sm:$0xff]
  %v234 = vld [vmem:[%s3 + $0x10] sm:$0xff]
  %v235 = vld [vmem:[%s3 + $0x18] sm:$0xff]
  %v236 = vld [vmem:[%s3 + $0x20] sm:$0xff]
  %v237 = vld [vmem:[%s3 + $0x28] sm:$0xff]
  %v238 = vld [vmem:[%s3 + $0x30] sm:$0xff]
  %v239 = vld [vmem:[%s3 + $0x38] sm:$0xff]
  %v240 = vld [vmem:[%s3 + $0x40] sm:$0xff]
  %v241 = vld [vmem:[%s3 + $0x48] sm:$0xff]
  %v242 = vld [vmem:[%s3 + $0x50] sm:$0xff]
  %v243 = vld [vmem:[%s3 + $0x58] sm:$0xff]
  %v244 = vld [vmem:[%s3 + $0x60] sm:$0xff]
  %v245 = vld [vmem:[%s3 + $0x68] sm:$0xff]
  %v246 = vld [vmem:[%s3 + $0x70] sm:$0xff]
  %v247 = vld [vmem:[%s3 + $0x78] sm:$0xff]
  %v248 = vld [vmem:[%s4] sm:$0x1]
  %v250 = vlaneseq
  %v251 = vshrl.u32 %v250, 7
  %v252 = vsub.s32 0, %v251
  %v253 = vrot.slane %v248, %v252
  %255 = vmatprep.subr.mxu0 0.0
  %256 = vmatpush1.msra.mxu0 %v232
  %257 = vmatprep.subr.mxu0 0.0
  %258 = vmatpush1.msra.mxu0 %v233
  %259 = vmatprep.subr.mxu0 0.0
  %260 = vmatpush1.msra.mxu0 %v234
  %261 = vmatprep.subr.mxu0 0.0
  %262 = vmatpush1.msra.mxu0 %v235
  %263 = vmatprep.subr.mxu0 0.0
  %264 = vmatpush1.msra.mxu0 %v236
  %265 = vmatprep.subr.mxu0 0.0
  %266 = vmatpush1.msra.mxu0 %v237
  %267 = vmatprep.subr.mxu0 0.0
  %268 = vmatpush1.msra.mxu0 %v238
  %269 = vmatprep.subr.mxu0 0.0
  %270 = vmatpush1.msra.mxu0 %v239
  %271 = vmatprep.subr.mxu0 0.0
  %272 = vmatpush1.msra.mxu0 %v240
  %273 = vmatprep.subr.mxu0 0.0
  %274 = vmatpush1.msra.mxu0 %v241
  %275 = vmatprep.subr.mxu0 0.0
  %276 = vmatpush1.msra.mxu0 %v242
  %277 = vmatprep.subr.mxu0 0.0
  %278 = vmatpush1.msra.mxu0 %v243
  %279 = vmatprep.subr.mxu0 0.0
  %280 = vmatpush1.msra.mxu0 %v244
  %281 = vmatprep.subr.mxu0 0.0
  %282 = vmatpush1.msra.mxu0 %v245
  %283 = vmatprep.subr.mxu0 0.0
  %284 = vmatpush1.msra.mxu0 %v246
  %285 = vmatprep.subr.mxu0 0.0
  %286 = vmatpush1.msra.mxu0 %v247
  %287 = vmatprep.subr.mxu0 0.0
  %288 = vmatpush1.msra.mxu0 0.0
  %289 = vmatprep.subr.mxu0 0.0
  %290 = vmatpush1.msra.mxu0 0.0
  %291 = vmatprep.subr.mxu0 0.0
  %292 = vmatpush1.msra.mxu0 0.0
  %293 = vmatprep.subr.mxu0 0.0
  %294 = vmatpush1.msra.mxu0 0.0
  %295 = vmatprep.subr.mxu0 0.0
  %296 = vmatpush1.msra.mxu0 0.0
  %297 = vmatprep.subr.mxu0 0.0
  %298 = vmatpush1.msra.mxu0 0.0
  %299 = vmatprep.subr.mxu0 0.0
  %300 = vmatpush1.msra.mxu0 0.0
  %301 = vmatprep.subr.mxu0 0.0
  %302 = vmatpush1.msra.mxu0 0.0
  %303 = vmatprep.subr.mxu0 0.0
  %304 = vmatpush1.msra.mxu0 0.0
  %305 = vmatprep.subr.mxu0 0.0
  %306 = vmatpush1.msra.mxu0 0.0
  %307 = vmatprep.subr.mxu0 0.0
  %308 = vmatpush1.msra.mxu0 0.0
  %309 = vmatprep.subr.mxu0 0.0
  %310 = vmatpush1.msra.mxu0 0.0
  %311 = vmatprep.subr.mxu0 0.0
  %312 = vmatpush1.msra.mxu0 0.0
  %313 = vmatprep.subr.mxu0 0.0
  %314 = vmatpush1.msra.mxu0 0.0
  %315 = vmatprep.subr.mxu0 0.0
  %316 = vmatpush1.msra.mxu0 0.0
  %317 = vmatprep.subr.mxu0 0.0
  %318 = vmatpush1.msra.mxu0 0.0
  %319 = vmatprep.mubr.f32.mxu0 0.0
  %320 = vmatmul.mubr.f32.gmra.mrb[0].mxu0 %v231
  %v321 = vpop.f32.mrb[0].mxu0
  %v322 = vadd.f32 %v253, %v321
  %v323 = vpop.f32.mrb[0].mxu0
  %324 = vdwg.mxu0
  %v325 = vmax.f32 %v322, 0.0
  %v326 = vld [vmem:[%s5] sm:$0xff]
  %v327 = vld [vmem:[%s5 + $0x8] sm:$0xff]
  %v328 = vld [vmem:[%s5 + $0x10] sm:$0xff]
  %v329 = vld [vmem:[%s5 + $0x18] sm:$0xff]
  %v330 = vld [vmem:[%s5 + $0x20] sm:$0xff]
  %v331 = vld [vmem:[%s5 + $0x28] sm:$0xff]
  %v332 = vld [vmem:[%s5 + $0x30] sm:$0xff]
  %v333 = vld [vmem:[%s5 + $0x38] sm:$0xff]
  %v334 = vld [vmem:[%s5 + $0x40] sm:$0xff]
  %v335 = vld [vmem:[%s5 + $0x48] sm:$0xff]
  %v336 = vld [vmem:[%s5 + $0x50] sm:$0xff]
  %v337 = vld [vmem:[%s5 + $0x58] sm:$0xff]
  %v338 = vld [vmem:[%s5 + $0x60] sm:$0xff]
  %v339 = vld [vmem:[%s5 + $0x68] sm:$0xff]
  %v340 = vld [vmem:[%s5 + $0x70] sm:$0xff]
  %v341 = vld [vmem:[%s5 + $0x78] sm:$0xff]
  %v342 = vld [vmem:[%s6] sm:$0x1]
  %v344 = vlaneseq
  %v345 = vshrl.u32 %v344, 7
  %v346 = vsub.s32 0, %v345
  %v347 = vrot.slane %v342, %v346
  %349 = vmatprep.subr.mxu0 0.0
  %350 = vmatpush1.msra.mxu0 %v326
  %351 = vmatprep.subr.mxu0 0.0
  %352 = vmatpush1.msra.mxu0 %v327
  %353 = vmatprep.subr.mxu0 0.0
  %354 = vmatpush1.msra.mxu0 %v328
  %355 = vmatprep.subr.mxu0 0.0
  %356 = vmatpush1.msra.mxu0 %v329
  %357 = vmatprep.subr.mxu0 0.0
  %358 = vmatpush1.msra.mxu0 %v330
  %359 = vmatprep.subr.mxu0 0.0
  %360 = vmatpush1.msra.mxu0 %v331
  %361 = vmatprep.subr.mxu0 0.0
  %362 = vmatpush1.msra.mxu0 %v332
  %363 = vmatprep.subr.mxu0 0.0
  %364 = vmatpush1.msra.mxu0 %v333
  %365 = vmatprep.subr.mxu0 0.0
  %366 = vmatpush1.msra.mxu0 %v334
  %367 = vmatprep.subr.mxu0 0.0
  %368 = vmatpush1.msra.mxu0 %v335
  %369 = vmatprep.subr.mxu0 0.0
  %370 = vmatpush1.msra.mxu0 %v336
  %371 = vmatprep.subr.mxu0 0.0
  %372 = vmatpush1.msra.mxu0 %v337
  %373 = vmatprep.subr.mxu0 0.0
  %374 = vmatpush1.msra.mxu0 %v338
  %375 = vmatprep.subr.mxu0 0.0
  %376 = vmatpush1.msra.mxu0 %v339
  %377 = vmatprep.subr.mxu0 0.0
  %378 = vmatpush1.msra.mxu0 %v340
  %379 = vmatprep.subr.mxu0 0.0
  %380 = vmatpush1.msra.mxu0 %v341
  %381 = vmatprep.subr.mxu0 0.0
  %382 = vmatpush1.msra.mxu0 0.0
  %383 = vmatprep.subr.mxu0 0.0
  %384 = vmatpush1.msra.mxu0 0.0
  %385 = vmatprep.subr.mxu0 0.0
  %386 = vmatpush1.msra.mxu0 0.0
  %387 = vmatprep.subr.mxu0 0.0
  %388 = vmatpush1.msra.mxu0 0.0
  %389 = vmatprep.subr.mxu0 0.0
  %390 = vmatpush1.msra.mxu0 0.0
  %391 = vmatprep.subr.mxu0 0.0
  %392 = vmatpush1.msra.mxu0 0.0
  %393 = vmatprep.subr.mxu0 0.0
  %394 = vmatpush1.msra.mxu0 0.0
  %395 = vmatprep.subr.mxu0 0.0
  %396 = vmatpush1.msra.mxu0 0.0
  %397 = vmatprep.subr.mxu0 0.0
  %398 = vmatpush1.msra.mxu0 0.0
  %399 = vmatprep.subr.mxu0 0.0
  %400 = vmatpush1.msra.mxu0 0.0
  %401 = vmatprep.subr.mxu0 0.0
  %402 = vmatpush1.msra.mxu0 0.0
  %403 = vmatprep.subr.mxu0 0.0
  %404 = vmatpush1.msra.mxu0 0.0
  %405 = vmatprep.subr.mxu0 0.0
  %406 = vmatpush1.msra.mxu0 0.0
  %407 = vmatprep.subr.mxu0 0.0
  %408 = vmatpush1.msra.mxu0 0.0
  %409 = vmatprep.subr.mxu0 0.0
  %410 = vmatpush1.msra.mxu0 0.0
  %411 = vmatprep.subr.mxu0 0.0
  %412 = vmatpush1.msra.mxu0 0.0
  %413 = vmatprep.mubr.f32.mxu0 0.0
  %414 = vmatmul.mubr.f32.gmra.mrb[0].mxu0 %v325
  %v415 = vpop.f32.mrb[0].mxu0
  %v416 = vadd.f32 %v347, %v415
  %v417 = vpop.f32.mrb[0].mxu0
  %418 = vdwg.mxu0
  %419 = vst [vmem:[%s7] sm:$0xff] %v416
  // Predicated region
  $region30: #{net_forward.5} parent=0 // pred_check
    _
  $region31: #{net_forward.5} parent=0 // pred_check_branch
    %421 = sbr.rel (0) target = $region33
  $region32: #{net_forward.5} parent=0 // pred_region
    _
  $region33: #{net_forward.5} parent=0 // pred_fallthru
    _
  // Predicated region
  $region34: #{net_forward.5} parent=0 // pred_check
    _
  $region35: #{net_forward.5} parent=0 // pred_check_branch
    %423 = sbr.rel (0) target = $region37
  $region36: #{net_forward.5} parent=0 // pred_region
    _
  $region37: #{net_forward.5} parent=0 // pred_fallthru
    _

</llo_original>
